<compile_context>
chip_gen: v7x
topology: tpu7x:2x2x1
jax: 0.10.0
libtpu: 0.0.40
codegen_flags: <defaults>
</compile_context>

<pallas_src>
import math
import functools

import jax
import jax.numpy as jnp
from jax.experimental import pallas as pl
from jax.experimental.pallas import tpu as pltpu

BN_EPS = 1e-5
LANES = 128


# ---------------------------------------------------------------------------
# Fused conv + (folded) BN + ReLU kernel — one GEMM over a VMEM im2col slab
# ---------------------------------------------------------------------------
def _conv_bn_relu_kernel(x_ref, w_ref, b_ref, o_ref, lhs_ref, *,
                         kh, kw, stride, tr, wo):
    # x_ref:   (1, Hp, Wp, Cin)      bf16  full (spatially pre-padded) sample
    # w_ref:   (kh*kw*Cin, TN)       bf16  folded-BN weight slab, one Cout tile
    # b_ref:   (1, TN)               f32   folded-BN bias, one Cout tile
    # o_ref:   (1, tr*Wo, TN)        bf16  one output row-tile x Cout tile
    # lhs_ref: (tr, Wo, kh*kw*Cin)   bf16  VMEM scratch: lane-dense im2col slab
    cin = x_ref.shape[-1]
    r = pl.program_id(2)
    row0 = pl.multiple_of(r * (tr * stride), tr * stride)

    if kh == 1 and kw == 1 and stride == 1:
        # 1x1 conv: the input tile already is the GEMM LHS.
        lhs = x_ref[0, pl.ds(row0, tr), :wo, :].reshape(tr * wo, cin)
    else:
        # Pack kh*kw shifted taps into the lane-dense K axis of the im2col slab.
        for i in range(kh):                      # static unroll over taps
            for j in range(kw):
                if stride == 1:
                    patch = x_ref[0, pl.ds(row0 + i, tr), j:j + wo, :]
                else:
                    patch = x_ref[0, pl.ds(row0 + i, tr, stride),
                                  pl.ds(j, wo, stride), :]
                t = i * kw + j
                lhs_ref[:, :, t * cin:(t + 1) * cin] = patch
        lhs = lhs_ref[...].reshape(tr * wo, kh * kw * cin)

    # One MXU GEMM, f32 accumulation (K = kh*kw*Cin).
    acc = jnp.dot(lhs, w_ref[...], preferred_element_type=jnp.float32)
    # f32 epilogue (bias + ReLU); cast to bf16 only at the final store.
    z = jnp.maximum(acc + b_ref[...], 0.0)
    o_ref[0] = z.astype(o_ref.dtype)


def _pick_row_tile(ho, wo):
    """Row tile tr (divisor of Ho) so tr*Wo ~ 128 GEMM rows and stays sublane-aligned."""
    tr = max(1, min(ho, 128 // max(wo, 1)))
    while ho % tr:
        tr -= 1
    if (tr * wo) % 8 != 0:       # keep the output block sublane-aligned
        tr = ho
    return tr


# ---------------------------------------------------------------------------
# NHWC-native wrapper (production path: no layout transposes)
# ---------------------------------------------------------------------------
def conv_norm_acti_nhwc(x_nhwc, params, *, stride=1, padding=0,
                        keep_cout_padding=False):
    """x_nhwc: (N, H, W, Cin) -> (N, Ho, Wo, Cout) bf16."""
    kh, kw = params["kh"], params["kw"]
    cin, cout, coutp = params["cin"], params["cout"], params["coutp"]
    N, H, W, C = x_nhwc.shape
    assert C == cin

    x = x_nhwc.astype(jnp.bfloat16)                              # bf16 MXU operand
    if padding:
        x = jnp.pad(x, ((0, 0), (padding, padding), (padding, padding), (0, 0)))
    Hp, Wp = x.shape[1], x.shape[2]
    Ho = (Hp - kh) // stride + 1
    Wo = (Wp - kw) // stride + 1
    M = Ho * Wo
    K = kh * kw * cin

    tr = _pick_row_tile(Ho, Wo)
    n_r = Ho // tr
    TN = LANES
    n_co = coutp // TN

    kernel = functools.partial(_conv_bn_relu_kernel, kh=kh, kw=kw,
                               stride=stride, tr=tr, wo=Wo)

    flops = 2 * N * M * K * coutp
    bytes_accessed = (x.size * 2 + params["w_mat"].size * 2
                      + params["bias"].size * 4 + N * M * coutp * 2)

    out = pl.pallas_call(
        kernel,
        out_shape=jax.ShapeDtypeStruct((N, M, coutp), jnp.bfloat16),
        grid=(N, n_co, n_r),
        in_specs=[
            # Full padded sample; resident in VMEM across (co, r).
            pl.BlockSpec((1, Hp, Wp, cin), lambda n, co, r: (n, 0, 0, 0)),
            # Weight slab tile (K, 128); resident along the innermost row axis.
            pl.BlockSpec((K, TN), lambda n, co, r: (0, co)),
            pl.BlockSpec((1, TN), lambda n, co, r: (0, co)),
        ],
        out_specs=pl.BlockSpec((1, tr * Wo, TN), lambda n, co, r: (n, r, co)),
        scratch_shapes=[pltpu.VMEM((tr, Wo, K), jnp.bfloat16)],
        compiler_params=pltpu.CompilerParams(
            dimension_semantics=("parallel", "parallel", "arbitrary"),
            vmem_limit_bytes=32 * 1024 * 1024,
        ),
        cost_estimate=pl.CostEstimate(
            flops=flops, transcendentals=0, bytes_accessed=bytes_accessed),
    )(x, params["w_mat"], params["bias"])

    out = out.reshape(N, Ho, Wo, coutp)
    if not keep_cout_padding:
        out = out[..., :cout]      # drop lane padding (padded channels are ReLU(0)=0)
    return out


# NCHW adapter for drop-in PyTorch-layout compatibility (single transpose each way).
def conv_norm_acti(x_nchw, params, *, stride=1, padding=0):
    x = jnp.transpose(x_nchw, (0, 2, 3, 1))                      # NCHW -> NHWC
    y = conv_norm_acti_nhwc(x, params, stride=stride, padding=padding)
    return jnp.transpose(y, (0, 3, 1, 2))                        # NHWC -> NCHW


# ---------------------------------------------------------------------------
# Parameter construction (BN folded at build time, Cout padded for lane density,
# weights pre-reshaped to the (kh*kw*Cin, Coutp) GEMM slab)
# ---------------------------------------------------------------------------
def make_conv_norm_acti_params(key, in_channels, out_channels, kernel_size):
    kh = kw = kernel_size
    wkey, bkey = jax.random.split(key)
    fan = kh * kw * out_channels
    w = jax.random.normal(wkey, (kh, kw, in_channels, out_channels),
                          jnp.float32) * math.sqrt(2.0 / fan)
    conv_bias = 0.01 * jax.random.normal(bkey, (out_channels,), jnp.float32)

    # BatchNorm2d eval-mode stats at construction: mean=0, var=1, gamma=1, beta=0.
    gamma = jnp.ones((out_channels,), jnp.float32)
    beta = jnp.zeros((out_channels,), jnp.float32)
    running_mean = jnp.zeros((out_channels,), jnp.float32)
    running_var = jnp.ones((out_channels,), jnp.float32)

    scale = gamma / jnp.sqrt(running_var + BN_EPS)
    w_folded = w * scale                                   # fold BN scale into weights
    bias_folded = (conv_bias - running_mean) * scale + beta

    coutp = ((out_channels + LANES - 1) // LANES) * LANES  # pad Cout -> multiple of 128
    w_pad = jnp.pad(w_folded, ((0, 0), (0, 0), (0, 0), (0, coutp - out_channels)))
    b_pad = jnp.pad(bias_folded, (0, coutp - out_channels))

    return {
        # (kh*kw*Cin, Coutp) GEMM weight slab; K ordering (i, j, c) matches the
        # in-kernel im2col tap packing.
        "w_mat": w_pad.reshape(kh * kw * in_channels, coutp).astype(jnp.bfloat16),
        "bias": b_pad.reshape(1, coutp).astype(jnp.float32),
        "w_folded_f32": w_folded,          # for the pure-JAX reference
        "bias_folded_f32": bias_folded,
        "kh": kh, "kw": kw, "cin": in_channels,
        "cout": out_channels, "coutp": coutp,
    }


# ---------------------------------------------------------------------------
# Pure-JAX reference (same bf16 operands, f32 accumulation, f32 output)
# ---------------------------------------------------------------------------
def conv_norm_acti_reference(x_nchw, params, *, stride=1, padding=0):
    x = jnp.transpose(x_nchw, (0, 2, 3, 1)).astype(jnp.bfloat16)
    w = params["w_folded_f32"].astype(jnp.bfloat16)
    y = jax.lax.conv_general_dilated(
        x, w, (stride, stride),
        [(padding, padding), (padding, padding)],
        dimension_numbers=("NHWC", "HWIO", "NHWC"),
        preferred_element_type=jnp.float32)
    y = jnp.maximum(y + params["bias_folded_f32"], 0.0)
    return jnp.transpose(y, (0, 3, 1, 2))


# ---------------------------------------------------------------------------
if __name__ == "__main__":
    key = jax.random.PRNGKey(0)
    pkey1, pkey2, xkey = jax.random.split(key, 3)

    N, Cin, H, W = 2, 16, 16, 16
    x = jax.random.normal(xkey, (N, Cin, H, W), jnp.float32)   # NCHW like PyTorch

    # Config A: 3x3 conv, stride 1, padding 1 (typical Conv_Norm_Acti use).
    pA = make_conv_norm_acti_params(pkey1, Cin, 32, 3)
    fwdA = jax.jit(lambda t: conv_norm_acti(t, pA, stride=1, padding=1))
    outA = jax.block_until_ready(fwdA(x))
    refA = jax.block_until_ready(conv_norm_acti_reference(x, pA, stride=1, padding=1))
    assert outA.shape == (N, 32, H, W) and outA.dtype == jnp.bfloat16
    assert float(jnp.max(jnp.abs(outA.astype(jnp.float32) - refA))) < 5e-2

    # Config B: 1x1 conv, stride 1, padding 0.
    pB = make_conv_norm_acti_params(pkey2, Cin, 64, 1)
    fwdB = jax.jit(lambda t: conv_norm_acti(t, pB, stride=1, padding=0))
    outB = jax.block_until_ready(fwdB(x))
    refB = jax.block_until_ready(conv_norm_acti_reference(x, pB, stride=1, padding=0))
    assert outB.shape == (N, 64, H, W) and outB.dtype == jnp.bfloat16
    assert float(jnp.max(jnp.abs(outB.astype(jnp.float32) - refB))) < 5e-2

    print("KERNEL_OK")
</pallas_src>

<mosaic_0001>
module attributes {stable_mosaic.version = 11 : i64} {
  func.func @_conv_bn_relu_kernel(%arg0: i32, %arg1: i32, %arg2: i32, %arg3: memref<1x18x18x16xbf16, #tpu.memory_space<vmem>>, %arg4: memref<144x128xbf16, #tpu.memory_space<vmem>>, %arg5: memref<1x128xf32, #tpu.memory_space<vmem>>, %arg6: memref<1x128x128xbf16, #tpu.memory_space<vmem>>, %arg7: memref<8x16x144xbf16, #tpu.memory_space<vmem>>) attributes {dimension_semantics = [#tpu.dimension_semantics<parallel>, #tpu.dimension_semantics<parallel>, #tpu.dimension_semantics<arbitrary>], iteration_bounds = array<i64: 2, 1, 2>, scalar_prefetch = 0 : i64, scratch_operands = 1 : i64, tpu.core_type = #tpu.core_type<tc>, window_params = [{transform_indices = @transform_0, window_bounds = array<i64: 1, 18, 18, 16>}, {transform_indices = @transform_1, window_bounds = array<i64: 144, 128>}, {transform_indices = @transform_2, window_bounds = array<i64: 1, 128>}, {transform_indices = @transform_3, window_bounds = array<i64: 1, 128, 128>}]} {
    %c8_i32 = arith.constant 8 : i32
    %0 = arith.muli %arg2, %c8_i32 : i32
    %1 = tpu.assume_multiple %0, 8 : i32
    %c0_i32 = arith.constant 0 : i32
    %2 = arith.addi %1, %c0_i32 : i32
    %c0 = arith.constant 0 : index
    %3 = arith.index_cast %2 : i32 to index
    %c0_0 = arith.constant 0 : index
    %c0_1 = arith.constant 0 : index
    %4 = vector.load %arg3[%c0, %3, %c0_0, %c0_1] : memref<1x18x18x16xbf16, #tpu.memory_space<vmem>>, vector<1x8x16x16xbf16>
    %5 = vector.shape_cast %4 : vector<1x8x16x16xbf16> to vector<8x16x16xbf16>
    %c0_2 = arith.constant 0 : index
    %c0_3 = arith.constant 0 : index
    %c0_4 = arith.constant 0 : index
    %6 = vector.load %arg7[%c0_2, %c0_3, %c0_4] : memref<8x16x144xbf16, #tpu.memory_space<vmem>>, vector<8x16x16xbf16>
    tpu.vector_store %arg7[%c0_2, %c0_3, %c0_4], %5 {strides = array<i32>} : memref<8x16x144xbf16, #tpu.memory_space<vmem>>, vector<8x16x16xbf16>,
    %c0_i32_5 = arith.constant 0 : i32
    %7 = arith.addi %1, %c0_i32_5 : i32
    %c0_6 = arith.constant 0 : index
    %8 = arith.index_cast %7 : i32 to index
    %c1 = arith.constant 1 : index
    %c0_7 = arith.constant 0 : index
    %9 = vector.load %arg3[%c0_6, %8, %c1, %c0_7] : memref<1x18x18x16xbf16, #tpu.memory_space<vmem>>, vector<1x8x16x16xbf16>
    %10 = vector.shape_cast %9 : vector<1x8x16x16xbf16> to vector<8x16x16xbf16>
    %c0_8 = arith.constant 0 : index
    %c0_9 = arith.constant 0 : index
    %c16 = arith.constant 16 : index
    %11 = vector.load %arg7[%c0_8, %c0_9, %c16] : memref<8x16x144xbf16, #tpu.memory_space<vmem>>, vector<8x16x16xbf16>
    tpu.vector_store %arg7[%c0_8, %c0_9, %c16], %10 {strides = array<i32>} : memref<8x16x144xbf16, #tpu.memory_space<vmem>>, vector<8x16x16xbf16>,
    %c0_i32_10 = arith.constant 0 : i32
    %12 = arith.addi %1, %c0_i32_10 : i32
    %c0_11 = arith.constant 0 : index
    %13 = arith.index_cast %12 : i32 to index
    %c2 = arith.constant 2 : index
    %c0_12 = arith.constant 0 : index
    %14 = vector.load %arg3[%c0_11, %13, %c2, %c0_12] : memref<1x18x18x16xbf16, #tpu.memory_space<vmem>>, vector<1x8x16x16xbf16>
    %15 = vector.shape_cast %14 : vector<1x8x16x16xbf16> to vector<8x16x16xbf16>
    %c0_13 = arith.constant 0 : index
    %c0_14 = arith.constant 0 : index
    %c32 = arith.constant 32 : index
    %16 = vector.load %arg7[%c0_13, %c0_14, %c32] : memref<8x16x144xbf16, #tpu.memory_space<vmem>>, vector<8x16x16xbf16>
    tpu.vector_store %arg7[%c0_13, %c0_14, %c32], %15 {strides = array<i32>} : memref<8x16x144xbf16, #tpu.memory_space<vmem>>, vector<8x16x16xbf16>,
    %c1_i32 = arith.constant 1 : i32
    %17 = arith.addi %1, %c1_i32 : i32
    %c0_15 = arith.constant 0 : index
    %18 = arith.index_cast %17 : i32 to index
    %c0_16 = arith.constant 0 : index
    %c0_17 = arith.constant 0 : index
    %19 = vector.load %arg3[%c0_15, %18, %c0_16, %c0_17] : memref<1x18x18x16xbf16, #tpu.memory_space<vmem>>, vector<1x8x16x16xbf16>
    %20 = vector.shape_cast %19 : vector<1x8x16x16xbf16> to vector<8x16x16xbf16>
    %c0_18 = arith.constant 0 : index
    %c0_19 = arith.constant 0 : index
    %c48 = arith.constant 48 : index
    %21 = vector.load %arg7[%c0_18, %c0_19, %c48] : memref<8x16x144xbf16, #tpu.memory_space<vmem>>, vector<8x16x16xbf16>
    tpu.vector_store %arg7[%c0_18, %c0_19, %c48], %20 {strides = array<i32>} : memref<8x16x144xbf16, #tpu.memory_space<vmem>>, vector<8x16x16xbf16>,
    %c1_i32_20 = arith.constant 1 : i32
    %22 = arith.addi %1, %c1_i32_20 : i32
    %c0_21 = arith.constant 0 : index
    %23 = arith.index_cast %22 : i32 to index
    %c1_22 = arith.constant 1 : index
    %c0_23 = arith.constant 0 : index
    %24 = vector.load %arg3[%c0_21, %23, %c1_22, %c0_23] : memref<1x18x18x16xbf16, #tpu.memory_space<vmem>>, vector<1x8x16x16xbf16>
    %25 = vector.shape_cast %24 : vector<1x8x16x16xbf16> to vector<8x16x16xbf16>
    %c0_24 = arith.constant 0 : index
    %c0_25 = arith.constant 0 : index
    %c64 = arith.constant 64 : index
    %26 = vector.load %arg7[%c0_24, %c0_25, %c64] : memref<8x16x144xbf16, #tpu.memory_space<vmem>>, vector<8x16x16xbf16>
    tpu.vector_store %arg7[%c0_24, %c0_25, %c64], %25 {strides = array<i32>} : memref<8x16x144xbf16, #tpu.memory_space<vmem>>, vector<8x16x16xbf16>,
    %c1_i32_26 = arith.constant 1 : i32
    %27 = arith.addi %1, %c1_i32_26 : i32
    %c0_27 = arith.constant 0 : index
    %28 = arith.index_cast %27 : i32 to index
    %c2_28 = arith.constant 2 : index
    %c0_29 = arith.constant 0 : index
    %29 = vector.load %arg3[%c0_27, %28, %c2_28, %c0_29] : memref<1x18x18x16xbf16, #tpu.memory_space<vmem>>, vector<1x8x16x16xbf16>
    %30 = vector.shape_cast %29 : vector<1x8x16x16xbf16> to vector<8x16x16xbf16>
    %c0_30 = arith.constant 0 : index
    %c0_31 = arith.constant 0 : index
    %c80 = arith.constant 80 : index
    %31 = vector.load %arg7[%c0_30, %c0_31, %c80] : memref<8x16x144xbf16, #tpu.memory_space<vmem>>, vector<8x16x16xbf16>
    tpu.vector_store %arg7[%c0_30, %c0_31, %c80], %30 {strides = array<i32>} : memref<8x16x144xbf16, #tpu.memory_space<vmem>>, vector<8x16x16xbf16>,
    %c2_i32 = arith.constant 2 : i32
    %32 = arith.addi %1, %c2_i32 : i32
    %c0_32 = arith.constant 0 : index
    %33 = arith.index_cast %32 : i32 to index
    %c0_33 = arith.constant 0 : index
    %c0_34 = arith.constant 0 : index
    %34 = vector.load %arg3[%c0_32, %33, %c0_33, %c0_34] : memref<1x18x18x16xbf16, #tpu.memory_space<vmem>>, vector<1x8x16x16xbf16>
    %35 = vector.shape_cast %34 : vector<1x8x16x16xbf16> to vector<8x16x16xbf16>
    %c0_35 = arith.constant 0 : index
    %c0_36 = arith.constant 0 : index
    %c96 = arith.constant 96 : index
    %36 = vector.load %arg7[%c0_35, %c0_36, %c96] : memref<8x16x144xbf16, #tpu.memory_space<vmem>>, vector<8x16x16xbf16>
    tpu.vector_store %arg7[%c0_35, %c0_36, %c96], %35 {strides = array<i32>} : memref<8x16x144xbf16, #tpu.memory_space<vmem>>, vector<8x16x16xbf16>,
    %c2_i32_37 = arith.constant 2 : i32
    %37 = arith.addi %1, %c2_i32_37 : i32
    %c0_38 = arith.constant 0 : index
    %38 = arith.index_cast %37 : i32 to index
    %c1_39 = arith.constant 1 : index
    %c0_40 = arith.constant 0 : index
    %39 = vector.load %arg3[%c0_38, %38, %c1_39, %c0_40] : memref<1x18x18x16xbf16, #tpu.memory_space<vmem>>, vector<1x8x16x16xbf16>
    %40 = vector.shape_cast %39 : vector<1x8x16x16xbf16> to vector<8x16x16xbf16>
    %c0_41 = arith.constant 0 : index
    %c0_42 = arith.constant 0 : index
    %c112 = arith.constant 112 : index
    %41 = vector.load %arg7[%c0_41, %c0_42, %c112] : memref<8x16x144xbf16, #tpu.memory_space<vmem>>, vector<8x16x16xbf16>
    tpu.vector_store %arg7[%c0_41, %c0_42, %c112], %40 {strides = array<i32>} : memref<8x16x144xbf16, #tpu.memory_space<vmem>>, vector<8x16x16xbf16>,
    %c2_i32_43 = arith.constant 2 : i32
    %42 = arith.addi %1, %c2_i32_43 : i32
    %c0_44 = arith.constant 0 : index
    %43 = arith.index_cast %42 : i32 to index
    %c2_45 = arith.constant 2 : index
    %c0_46 = arith.constant 0 : index
    %44 = vector.load %arg3[%c0_44, %43, %c2_45, %c0_46] : memref<1x18x18x16xbf16, #tpu.memory_space<vmem>>, vector<1x8x16x16xbf16>
    %45 = vector.shape_cast %44 : vector<1x8x16x16xbf16> to vector<8x16x16xbf16>
    %c0_47 = arith.constant 0 : index
    %c0_48 = arith.constant 0 : index
    %c128 = arith.constant 128 : index
    %46 = vector.load %arg7[%c0_47, %c0_48, %c128] : memref<8x16x144xbf16, #tpu.memory_space<vmem>>, vector<8x16x16xbf16>
    tpu.vector_store %arg7[%c0_47, %c0_48, %c128], %45 {strides = array<i32>} : memref<8x16x144xbf16, #tpu.memory_space<vmem>>, vector<8x16x16xbf16>,
    %c0_49 = arith.constant 0 : index
    %c0_50 = arith.constant 0 : index
    %c0_51 = arith.constant 0 : index
    %47 = vector.load %arg7[%c0_49, %c0_50, %c0_51] : memref<8x16x144xbf16, #tpu.memory_space<vmem>>, vector<8x16x144xbf16>
    %48 = vector.shape_cast %47 : vector<8x16x144xbf16> to vector<128x144xbf16>
    %c0_52 = arith.constant 0 : index
    %c0_53 = arith.constant 0 : index
    %49 = vector.load %arg4[%c0_52, %c0_53] : memref<144x128xbf16, #tpu.memory_space<vmem>>, vector<144x128xbf16>
    %cst = arith.constant dense<0.000000e+00> : vector<128x128xf32>
    %50 = tpu.matmul %48, %49, %cst {dimension_numbers = #tpu.dot_dimension_numbers<[1], [0], [0], [1], [0, 0, 1, 1], [], []>} : vector<128x144xbf16>, vector<144x128xbf16>, vector<128x128xf32> -> vector<128x128xf32>
    %c0_54 = arith.constant 0 : index
    %c0_55 = arith.constant 0 : index
    %51 = vector.load %arg5[%c0_54, %c0_55] : memref<1x128xf32, #tpu.memory_space<vmem>>, vector<1x128xf32>
    %52 = vector.broadcast %51 : vector<1x128xf32> to vector<128x128xf32>
    %53 = arith.addf %50, %52 : vector<128x128xf32>
    %cst_56 = arith.constant 0.000000e+00 : f32
    %54 = vector.broadcast %cst_56 : f32 to vector<128x128xf32>
    %55 = arith.maximumf %53, %54 : vector<128x128xf32>
    %56 = arith.truncf %55 : vector<128x128xf32> to vector<128x128xbf16>
    %c0_57 = arith.constant 0 : index
    %c0_58 = arith.constant 0 : index
    %c0_59 = arith.constant 0 : index
    %57 = vector.load %arg6[%c0_57, %c0_58, %c0_59] : memref<1x128x128xbf16, #tpu.memory_space<vmem>>, vector<1x128x128xbf16>
    %58 = vector.shape_cast %57 : vector<1x128x128xbf16> to vector<128x128xbf16>
    %59 = vector.shape_cast %56 : vector<128x128xbf16> to vector<1x128x128xbf16>
    tpu.vector_store %arg6[%c0_57, %c0_58, %c0_59], %59 {strides = array<i32>} : memref<1x128x128xbf16, #tpu.memory_space<vmem>>, vector<1x128x128xbf16>,
    return
  }
  func.func @transform_0(%arg0: i32, %arg1: i32, %arg2: i32) -> (i32, i32, i32, i32) {
    %c0_i32 = arith.constant 0 : i32
    %c0_i32_0 = arith.constant 0 : i32
    %c0_i32_1 = arith.constant 0 : i32
    %c0_i32_2 = arith.constant 0 : i32
    return %arg0, %c0_i32, %c0_i32_0, %c0_i32_1 : i32, i32, i32, i32
  }
  func.func @transform_1(%arg0: i32, %arg1: i32, %arg2: i32) -> (i32, i32) {
    %c0_i32 = arith.constant 0 : i32
    %c0_i32_0 = arith.constant 0 : i32
    return %c0_i32, %arg1 : i32, i32
  }
  func.func @transform_2(%arg0: i32, %arg1: i32, %arg2: i32) -> (i32, i32) {
    %c0_i32 = arith.constant 0 : i32
    %c0_i32_0 = arith.constant 0 : i32
    return %c0_i32, %arg1 : i32, i32
  }
  func.func @transform_3(%arg0: i32, %arg1: i32, %arg2: i32) -> (i32, i32, i32) {
    %c0_i32 = arith.constant 0 : i32
    return %arg0, %arg2, %arg1 : i32, i32, i32
  }
}

</mosaic_0001>

<llo_original>
// kernel: _lambda_.1
$region0: #{_lambda_.1}
  #allocation0 [shape = 'u32[]', space=smem, size = 0x4, offset = 0x4, fixed_abs, tag = 'smem constant byte address 0x4 - core index']
  #allocation1 [shape = 'u32[144,128]{1,0:T(1,128)}', space=vmem, size = 0x12000, scoped, tag = 'internal scratch']
  #allocation2 [shape = 'bf16[8,16,144]{2,1,0:T(16,128)(2,1)}', space=vmem, size = 0x10000, scoped, tag = 'scratch operand']
  %s0 = inlined_call_operand.vmem [shape: bf16[2,18,18,16], index: 0, kind: input, shape index: {}]
  %s1 = inlined_call_operand.vmem [shape: bf16[144,128], index: 1, kind: input, shape index: {}]
  %s2 = inlined_call_operand.vmem [shape: f32[1,128], index: 2, kind: input, shape index: {}]
  %s3 = inlined_call_operand.vmem [shape: bf16[2,256,128], index: 3, kind: output, shape index: {}]
  %s4 = sld [smem:[#allocation0]]
  $region45: #{_lambda_.1} parent=0
    _
  %s6 = ssub.s32 1, %s4
  %s7 = scalar_select 0, %s6, %s4
  loop: start=0, step=1, limit=6
  $region2: #{_lambda_.1} parent=0 // loop_pre_header
    _
  $region3: #{_lambda_.1} parent=0 // loop_header
    %s9 = sphi 0, %s13
    %p10 = scmp.ge.s32.totalorder %s9, 6
    %s16 = sphi 0, %s35
    %s17 = sphi 0, %s31
    %s18 = sphi 0, %s27
    %s19 = sphi 0, %s16
    %s20 = sphi 0, %s17
    %s21 = sphi 0, %s18
    %s22 = sphi 0, %s19
    %s23 = sphi 0, %s20
    %s24 = sphi 0, %s21
    %s38 = sphi 0, %s40
    %s41 = sphi 0, %s38
    %s42 = sphi 0, %s41
    %s58 = sphi 0, %s42
    %s64 = sphi 0, %s66
    %s67 = sphi 0, %s64
    %s68 = sphi 0, %s67
    %s84 = sphi 0, %s68
    %s90 = sphi 0, %s92
    %s93 = sphi 0, %s90
    %s94 = sphi 0, %s93
    %s110 = sphi 0, %s94
    %s120 = sphi 0, %s122
    %s123 = sphi 0, %s120
    %s124 = sphi 0, %s123
    %s140 = sphi 0, %s124
  $region4: #{_lambda_.1} parent=0 // loop_header_branch
    %12 = sbr.rel (%p10) target = $region8
  $region5: #{_lambda_.1} parent=0 // loop_body
    %s14 = ssub.s32 %s9, 1
    %s15 = ssub.s32 %s9, 2
    %s25 = sadd.s32 1, %s18
    %p26 = scmp.ge.s32.totalorder %s25, 2
    %s27 = scalar_select %p26, 0, %s25
    %s28 = sadd.s32 1, %s17
    %s29 = scalar_select %p26, %s28, %s17
    %p30 = scmp.ge.s32.totalorder %s29, 1
    %s31 = scalar_select %p30, 0, %s29
    %s32 = sadd.s32 1, %s16
    %s33 = scalar_select %p30, %s32, %s16
    %p34 = scmp.ge.s32.totalorder %s33, 2
    %s35 = scalar_select %p34, 0, %s33
    %s36 = ssub.s32 %s16, %s35
    %p37 = scmp.eq.s32.totalorder %s36, 0
    %s39 = sadd.s32 %s38, 1
    %s40 = scalar_select %p37, %s38, %s39
    %p43 = pneg %p37
    %p44 = scmp.eq.s32.totalorder %s9, 3
    %p45 = por %p43, %p44
    %p46 = scmp.ne.s32.totalorder %s38, %s41
    %p47 = scmp.eq.s32.totalorder %s9, 0
    %p48 = por %p46, %p47
    %p49 = scmp.ne.s32.totalorder %s38, %s41
    %p50 = scmp.eq.s32.totalorder %s14, 3
    %p51 = por %p49, %p50
    %p52 = scmp.ne.s32.totalorder %s41, %s42
    %p53 = scmp.eq.s32.totalorder %s14, 0
    %p54 = por %p52, %p53
    %p55 = scmp.ne.s32.totalorder %s41, %s42
    %p56 = scmp.eq.s32.totalorder %s15, 3
    %p57 = por %p55, %p56
    %p59 = scmp.ne.s32.totalorder %s42, %s58
    %p60 = scmp.eq.s32.totalorder %s15, 0
    %p61 = por %p59, %p60
    %s62 = ssub.s32 %s17, %s31
    %p63 = scmp.eq.s32.totalorder %s62, 0
    %s65 = sadd.s32 %s64, 1
    %s66 = scalar_select %p63, %s64, %s65
    %p69 = pneg %p63
    %p70 = scmp.eq.s32.totalorder %s9, 3
    %p71 = por %p69, %p70
    %p72 = scmp.ne.s32.totalorder %s64, %s67
    %p73 = scmp.eq.s32.totalorder %s9, 0
    %p74 = por %p72, %p73
    %p75 = scmp.ne.s32.totalorder %s64, %s67
    %p76 = scmp.eq.s32.totalorder %s14, 3
    %p77 = por %p75, %p76
    %p78 = scmp.ne.s32.totalorder %s67, %s68
    %p79 = scmp.eq.s32.totalorder %s14, 0
    %p80 = por %p78, %p79
    %p81 = scmp.ne.s32.totalorder %s67, %s68
    %p82 = scmp.eq.s32.totalorder %s15, 3
    %p83 = por %p81, %p82
    %p85 = scmp.ne.s32.totalorder %s68, %s84
    %p86 = scmp.eq.s32.totalorder %s15, 0
    %p87 = por %p85, %p86
    %s88 = ssub.s32 %s17, %s31
    %p89 = scmp.eq.s32.totalorder %s88, 0
    %s91 = sadd.s32 %s90, 1
    %s92 = scalar_select %p89, %s90, %s91
    %p95 = pneg %p89
    %p96 = scmp.eq.s32.totalorder %s9, 3
    %p97 = por %p95, %p96
    %p98 = scmp.ne.s32.totalorder %s90, %s93
    %p99 = scmp.eq.s32.totalorder %s9, 0
    %p100 = por %p98, %p99
    %p101 = scmp.ne.s32.totalorder %s90, %s93
    %p102 = scmp.eq.s32.totalorder %s14, 3
    %p103 = por %p101, %p102
    %p104 = scmp.ne.s32.totalorder %s93, %s94
    %p105 = scmp.eq.s32.totalorder %s14, 0
    %p106 = por %p104, %p105
    %p107 = scmp.ne.s32.totalorder %s93, %s94
    %p108 = scmp.eq.s32.totalorder %s15, 3
    %p109 = por %p107, %p108
    %p111 = scmp.ne.s32.totalorder %s94, %s110
    %p112 = scmp.eq.s32.totalorder %s15, 0
    %p113 = por %p111, %p112
    %s114 = ssub.s32 %s16, %s35
    %s115 = ssub.s32 %s18, %s27
    %s116 = sor.u32 %s114, %s115
    %s117 = ssub.s32 %s17, %s31
    %s118 = sor.u32 %s116, %s117
    %p119 = scmp.eq.s32.totalorder %s118, 0
    %s121 = sadd.s32 %s120, 1
    %s122 = scalar_select %p119, %s120, %s121
    %p125 = pneg %p119
    %p126 = scmp.eq.s32.totalorder %s9, 3
    %p127 = por %p125, %p126
    %p128 = scmp.ne.s32.totalorder %s120, %s123
    %p129 = scmp.eq.s32.totalorder %s9, 0
    %p130 = por %p128, %p129
    %p131 = scmp.ne.s32.totalorder %s120, %s123
    %p132 = scmp.eq.s32.totalorder %s14, 3
    %p133 = por %p131, %p132
    %p134 = scmp.ne.s32.totalorder %s123, %s124
    %p135 = scmp.eq.s32.totalorder %s14, 0
    %p136 = por %p134, %p135
    %p137 = scmp.ne.s32.totalorder %s123, %s124
    %p138 = scmp.eq.s32.totalorder %s15, 3
    %p139 = por %p137, %p138
    %p141 = scmp.ne.s32.totalorder %s124, %s140
    %p142 = scmp.eq.s32.totalorder %s15, 0
    %p143 = por %p141, %p142
    %p144 = scmp.le.s32.totalorder 1, %s9
    %p145 = scmp.lt.s32.totalorder %s9, 5
    %p146 = pnand %p144, %p145
    %p147 = pneg %p146
    // Predicated region
    $region9: #{_lambda_.1} parent=5 // pred_check
      _
    $region10: #{_lambda_.1} parent=5 // pred_check_branch
      %149 = sbr.rel (%p146) target = $region12
    $region11: #{_lambda_.1} parent=5 // pred_region
      %s150 = ssub.s32 %s9, 1
      // Predicated region
      $region13: #{_lambda_.1} parent=11 // pred_check
        %p151 = pneg %p80
      $region14: #{_lambda_.1} parent=11 // pred_check_branch
        %153 = sbr.rel (%p151) target = $region16
      $region15: #{_lambda_.1} parent=11 // pred_region
        %p154 = scmp.lt.s32.totalorder %s20, 0
        %s155 = scalar_select %p154, %s20, 0
        %s156 = smul.addr %s155, 4
        %s157 = scalar_lea.vmem %s1, %s156
      $region16: #{_lambda_.1} parent=11 // pred_fallthru
        _
      // Predicated region
      $region17: #{_lambda_.1} parent=11 // pred_check
        %p158 = pneg %p106
      $region18: #{_lambda_.1} parent=11 // pred_check_branch
        %160 = sbr.rel (%p158) target = $region20
      $region19: #{_lambda_.1} parent=11 // pred_region
        %p161 = scmp.lt.s32.totalorder %s20, 0
        %s162 = scalar_select %p161, %s20, 0
        %s163 = scalar_lea.vmem %s2, %s162
      $region20: #{_lambda_.1} parent=11 // pred_fallthru
        _
    $region12: #{_lambda_.1} parent=5 // pred_fallthru
      _
    %p164 = scmp.lt.s32.totalorder %s9, 4
    // Predicated region
    $region21: #{_lambda_.1} parent=5 // pred_check
      %p165 = pneg %p164
    $region22: #{_lambda_.1} parent=5 // pred_check_branch
      %167 = sbr.rel (%p165) target = $region24
    $region23: #{_lambda_.1} parent=5 // pred_region
      // Predicated region
      $region25: #{_lambda_.1} parent=23 // pred_check
        %p168 = pneg %p48
      $region26: #{_lambda_.1} parent=23 // pred_check_branch
        %170 = sbr.rel (%p168) target = $region28
      $region27: #{_lambda_.1} parent=23 // pred_region
        %p171 = scmp.lt.s32.totalorder %s16, 1
        %s172 = scalar_select %p171, %s16, 1
        %s173 = smul.addr %s172, 54
        %s174 = smul.addr %s173, 4
        %s175 = scalar_lea.vmem %s0, %s174
      $region28: #{_lambda_.1} parent=23 // pred_fallthru
        _
    $region24: #{_lambda_.1} parent=5 // pred_fallthru
      _
    %p176 = scmp.le.s32.totalorder 1, %s9
    %p177 = scmp.lt.s32.totalorder %s9, 5
    %p178 = pnand %p176, %p177
    %p179 = pneg %p178
    // Predicated region
    $region29: #{_lambda_.1} parent=5 // pred_check
      _
    $region30: #{_lambda_.1} parent=5 // pred_check_branch
      %181 = sbr.rel (%p178) target = $region32
    $region31: #{_lambda_.1} parent=5 // pred_region
      %s182 = ssub.s32 %s9, 1
      %p183 = scmp.lt.s32.totalorder %s19, 1
      %s184 = scalar_select %p183, %s19, 1
      %s185 = smul.addr %s184, 54
      %s186 = smul.addr %s185, 4
      %s187 = scalar_lea.vmem %s0, %s186
      %p188 = pneg %p54
      %p189 = pneg %p51
      %p190 = scmp.lt.s32.totalorder %s20, 0
      %s191 = scalar_select %p190, %s20, 0
      %s192 = smul.addr %s191, 4
      %s193 = scalar_lea.vmem %s1, %s192
      %p194 = pneg %p80
      %p195 = pneg %p77
      %p196 = scmp.lt.s32.totalorder %s20, 0
      %s197 = scalar_select %p196, %s20, 0
      %s198 = scalar_lea.vmem %s2, %s197
      %p199 = pneg %p106
      %p200 = pneg %p103
      %p201 = pneg %p136
      %p202 = pneg %p133
      %s203 = smul.u32 16, %s21
      %p204 = scmp.lt.s32.totalorder %s19, 1
      %s205 = scalar_select %p204, %s19, 1
      %p206 = scmp.lt.s32.totalorder %s203, 31
      %s207 = scalar_select %p206, %s203, 31
      %p208 = scmp.lt.s32.totalorder %s20, 0
      %s209 = scalar_select %p208, %s20, 0
      %s210 = sadd.s32 %s209, %s207
      %s211 = smul.addr %s205, 32
      %s212 = sadd.s32 %s210, %s211
      %s213 = smul.addr %s212, 4
      %s214 = scalar_lea.vmem %s3, %s213
      %p215 = scmp.lt.s32.totalorder %s19, 1
      %s216 = scalar_select %p215, %s19, 1
      %s217 = smul.addr %s216, 54
      %s218 = smul.addr %s217, 4
      %s219 = scalar_lea.vmem %s0, %s218
      %p220 = scmp.lt.s32.totalorder %s20, 0
      %s221 = scalar_select %p220, %s20, 0
      %s222 = smul.addr %s221, 4
      %s223 = scalar_lea.vmem %s1, %s222
      %p224 = scmp.lt.s32.totalorder %s20, 0
      %s225 = scalar_select %p224, %s20, 0
      %s226 = scalar_lea.vmem %s2, %s225
      %s227 = smul.u32 16, %s21
      %p228 = scmp.lt.s32.totalorder %s19, 1
      %s229 = scalar_select %p228, %s19, 1
      %p230 = scmp.lt.s32.totalorder %s227, 31
      %s231 = scalar_select %p230, %s227, 31
      %p232 = scmp.lt.s32.totalorder %s20, 0
      %s233 = scalar_select %p232, %s20, 0
      %s234 = sadd.s32 %s233, %s231
      %s235 = smul.addr %s229, 32
      %s236 = sadd.s32 %s234, %s235
      %s237 = smul.addr %s236, 4
      %s238 = scalar_lea.vmem %s3, %s237
      %s239 = smul.u32 16, %s21
      %s241 = smul.u32 %s21, 8
      %s242 = smul.u32 %s241, 3
      %s243 = smul.addr %s242, 4
      %s244 = scalar_lea.vmem %s219, %s243
      %v245 = vld [vmem:[%s244] sm:$0xf]
      %v246 = vld [vmem:[%s244 + $0x4] sm:$0xf]
      %v247 = vld [vmem:[%s244 + $0xc] sm:$0xf]
      %v248 = vld [vmem:[%s244 + $0x10] sm:$0xf]
      %v249 = vld [vmem:[%s244 + $0x18] sm:$0xf]
      %v250 = vld [vmem:[%s244 + $0x1c] sm:$0xf]
      %v251 = vld [vmem:[%s244 + $0x24] sm:$0xf]
      %v252 = vld [vmem:[%s244 + $0x28] sm:$0xf]
      %v253 = vld [vmem:[%s244 + $0x30] sm:$0xf]
      %v254 = vld [vmem:[%s244 + $0x34] sm:$0xf]
      %v255 = vld [vmem:[%s244 + $0x3c] sm:$0xf]
      %v256 = vld [vmem:[%s244 + $0x40] sm:$0xf]
      %v257 = vld [vmem:[%s244 + $0x48] sm:$0xf]
      %v258 = vld [vmem:[%s244 + $0x4c] sm:$0xf]
      %v259 = vld [vmem:[%s244 + $0x54] sm:$0xf]
      %v260 = vld [vmem:[%s244 + $0x58] sm:$0xf]
      %v277 = vunpack.c.l.b16 %v245
      %v278 = vunpack.c.l.b16 %v246
      %v279 = vunpack.c.l.b16 %v247
      %v280 = vunpack.c.l.b16 %v248
      %v281 = vunpack.c.l.b16 %v249
      %v282 = vunpack.c.l.b16 %v250
      %v283 = vunpack.c.l.b16 %v251
      %v284 = vunpack.c.l.b16 %v252
      %v285 = vunpack.c.l.b16 %v253
      %v286 = vunpack.c.l.b16 %v254
      %v287 = vunpack.c.l.b16 %v255
      %v288 = vunpack.c.l.b16 %v256
      %v289 = vunpack.c.l.b16 %v257
      %v290 = vunpack.c.l.b16 %v258
      %v291 = vunpack.c.l.b16 %v259
      %v292 = vunpack.c.l.b16 %v260
      %v293 = vpack.c.b16 %v278, %v277
      %v294 = vpack.c.b16 %v280, %v279
      %v295 = vpack.c.b16 %v282, %v281
      %v296 = vpack.c.b16 %v284, %v283
      %v297 = vpack.c.b16 %v286, %v285
      %v298 = vpack.c.b16 %v288, %v287
      %v299 = vpack.c.b16 %v290, %v289
      %v300 = vpack.c.b16 %v292, %v291
      %vm309 = vcmask 130048
      %310 = vst.msk [vmem:[#allocation2] sm:$0xff] %vm309, %v293
      %311 = vst.msk [vmem:[#allocation2 + $0x10] sm:$0xff] %vm309, %v294
      %312 = vst.msk [vmem:[#allocation2 + $0x20] sm:$0xff] %vm309, %v295
      %313 = vst.msk [vmem:[#allocation2 + $0x30] sm:$0xff] %vm309, %v296
      %314 = vst.msk [vmem:[#allocation2 + $0x40] sm:$0xff] %vm309, %v297
      %315 = vst.msk [vmem:[#allocation2 + $0x50] sm:$0xff] %vm309, %v298
      %316 = vst.msk [vmem:[#allocation2 + $0x60] sm:$0xff] %vm309, %v299
      %317 = vst.msk [vmem:[#allocation2 + $0x70] sm:$0xff] %vm309, %v300
      %v318 = vld [vmem:[%s244] sm:$0xf]
      %v319 = vld [vmem:[%s244 + $0x4] sm:$0xf]
      %v320 = vld [vmem:[%s244 + $0x8] sm:$0x1]
      %v321 = vld [vmem:[%s244 + $0xc] sm:$0xf]
      %v322 = vld [vmem:[%s244 + $0x10] sm:$0xf]
      %v323 = vld [vmem:[%s244 + $0x14] sm:$0x1]
      %v324 = vld [vmem:[%s244 + $0x18] sm:$0xf]
      %v325 = vld [vmem:[%s244 + $0x1c] sm:$0xf]
      %v326 = vld [vmem:[%s244 + $0x20] sm:$0x1]
      %v327 = vld [vmem:[%s244 + $0x24] sm:$0xf]
      %v328 = vld [vmem:[%s244 + $0x28] sm:$0xf]
      %v329 = vld [vmem:[%s244 + $0x2c] sm:$0x1]
      %v330 = vld [vmem:[%s244 + $0x30] sm:$0xf]
      %v331 = vld [vmem:[%s244 + $0x34] sm:$0xf]
      %v332 = vld [vmem:[%s244 + $0x38] sm:$0x1]
      %v333 = vld [vmem:[%s244 + $0x3c] sm:$0xf]
      %v334 = vld [vmem:[%s244 + $0x40] sm:$0xf]
      %v335 = vld [vmem:[%s244 + $0x44] sm:$0x1]
      %v336 = vld [vmem:[%s244 + $0x48] sm:$0xf]
      %v337 = vld [vmem:[%s244 + $0x4c] sm:$0xf]
      %v338 = vld [vmem:[%s244 + $0x50] sm:$0x1]
      %v339 = vld [vmem:[%s244 + $0x54] sm:$0xf]
      %v340 = vld [vmem:[%s244 + $0x58] sm:$0xf]
      %v341 = vld [vmem:[%s244 + $0x5c] sm:$0x1]
      %v366 = vunpack.c.l.b16 %v318
      %v367 = vunpack.c.l.b16 %v319
      %v368 = vunpack.c.l.b16 %v320
      %v369 = vunpack.c.l.b16 %v321
      %v370 = vunpack.c.l.b16 %v322
      %v371 = vunpack.c.l.b16 %v323
      %v372 = vunpack.c.l.b16 %v324
      %v373 = vunpack.c.l.b16 %v325
      %v374 = vunpack.c.l.b16 %v326
      %v375 = vunpack.c.l.b16 %v327
      %v376 = vunpack.c.l.b16 %v328
      %v377 = vunpack.c.l.b16 %v329
      %v378 = vunpack.c.l.b16 %v330
      %v379 = vunpack.c.l.b16 %v331
      %v380 = vunpack.c.l.b16 %v332
      %v381 = vunpack.c.l.b16 %v333
      %v382 = vunpack.c.l.b16 %v334
      %v383 = vunpack.c.l.b16 %v335
      %v384 = vunpack.c.l.b16 %v336
      %v385 = vunpack.c.l.b16 %v337
      %v386 = vunpack.c.l.b16 %v338
      %v387 = vunpack.c.l.b16 %v339
      %v388 = vunpack.c.l.b16 %v340
      %v389 = vunpack.c.l.b16 %v341
      %v390 = vpack.c.b16 %v367, %v366
      %v391 = vpack.c.b16 %v368, %v368
      %v392 = vpack.c.b16 %v370, %v369
      %v393 = vpack.c.b16 %v371, %v371
      %v394 = vpack.c.b16 %v373, %v372
      %v395 = vpack.c.b16 %v374, %v374
      %v396 = vpack.c.b16 %v376, %v375
      %v397 = vpack.c.b16 %v377, %v377
      %v398 = vpack.c.b16 %v379, %v378
      %v399 = vpack.c.b16 %v380, %v380
      %v400 = vpack.c.b16 %v382, %v381
      %v401 = vpack.c.b16 %v383, %v383
      %v402 = vpack.c.b16 %v385, %v384
      %v403 = vpack.c.b16 %v386, %v386
      %v404 = vpack.c.b16 %v388, %v387
      %v405 = vpack.c.b16 %v389, %v389
      %vm406 = vsmask.f32 7424
      %v408 = vshrl.u32 %v390, 16
      %v410 = vshll.u32 %v390, 16
      %v412 = vrot.slane %v410, 1
      %v413 = vor.u32 %v408, %v412
      %v415 = vshll.u32 %v391, 16
      %v417 = vrot.slane %v415, 1
      %v418 = vsel %vm406, %v413, %v417
      %v420 = vshrl.u32 %v392, 16
      %v422 = vshll.u32 %v392, 16
      %v424 = vrot.slane %v422, 1
      %v425 = vor.u32 %v420, %v424
      %v427 = vshll.u32 %v393, 16
      %v429 = vrot.slane %v427, 1
      %v430 = vsel %vm406, %v425, %v429
      %v432 = vshrl.u32 %v394, 16
      %v434 = vshll.u32 %v394, 16
      %v436 = vrot.slane %v434, 1
      %v437 = vor.u32 %v432, %v436
      %v439 = vshll.u32 %v395, 16
      %v441 = vrot.slane %v439, 1
      %v442 = vsel %vm406, %v437, %v441
      %v444 = vshrl.u32 %v396, 16
      %v446 = vshll.u32 %v396, 16
      %v448 = vrot.slane %v446, 1
      %v449 = vor.u32 %v444, %v448
      %v451 = vshll.u32 %v397, 16
      %v453 = vrot.slane %v451, 1
      %v454 = vsel %vm406, %v449, %v453
      %v456 = vshrl.u32 %v398, 16
      %v458 = vshll.u32 %v398, 16
      %v460 = vrot.slane %v458, 1
      %v461 = vor.u32 %v456, %v460
      %v463 = vshll.u32 %v399, 16
      %v465 = vrot.slane %v463, 1
      %v466 = vsel %vm406, %v461, %v465
      %v468 = vshrl.u32 %v400, 16
      %v470 = vshll.u32 %v400, 16
      %v472 = vrot.slane %v470, 1
      %v473 = vor.u32 %v468, %v472
      %v475 = vshll.u32 %v401, 16
      %v477 = vrot.slane %v475, 1
      %v478 = vsel %vm406, %v473, %v477
      %v480 = vshrl.u32 %v402, 16
      %v482 = vshll.u32 %v402, 16
      %v484 = vrot.slane %v482, 1
      %v485 = vor.u32 %v480, %v484
      %v487 = vshll.u32 %v403, 16
      %v489 = vrot.slane %v487, 1
      %v490 = vsel %vm406, %v485, %v489
      %v492 = vshrl.u32 %v404, 16
      %v494 = vshll.u32 %v404, 16
      %v496 = vrot.slane %v494, 1
      %v497 = vor.u32 %v492, %v496
      %v499 = vshll.u32 %v405, 16
      %v501 = vrot.slane %v499, 1
      %v502 = vsel %vm406, %v497, %v501
      %503 = vrot.lane.b32.xlu0 %v418, 16
      %v504 = vpop.permute.xlu0 %503
      %505 = vrot.lane.b32.xlu0 %v430, 16
      %v506 = vpop.permute.xlu0 %505
      %507 = vrot.lane.b32.xlu0 %v442, 16
      %v508 = vpop.permute.xlu0 %507
      %509 = vrot.lane.b32.xlu0 %v454, 16
      %v510 = vpop.permute.xlu0 %509
      %511 = vrot.lane.b32.xlu0 %v466, 16
      %v512 = vpop.permute.xlu0 %511
      %513 = vrot.lane.b32.xlu0 %v478, 16
      %v514 = vpop.permute.xlu0 %513
      %515 = vrot.lane.b32.xlu0 %v490, 16
      %v516 = vpop.permute.xlu0 %515
      %517 = vrot.lane.b32.xlu0 %v502, 16
      %v518 = vpop.permute.xlu0 %517
      %vm527 = vcmask 261248
      %528 = vst.msk [vmem:[#allocation2] sm:$0xff] %vm527, %v504
      %529 = vst.msk [vmem:[#allocation2 + $0x10] sm:$0xff] %vm527, %v506
      %530 = vst.msk [vmem:[#allocation2 + $0x20] sm:$0xff] %vm527, %v508
      %531 = vst.msk [vmem:[#allocation2 + $0x30] sm:$0xff] %vm527, %v510
      %532 = vst.msk [vmem:[#allocation2 + $0x40] sm:$0xff] %vm527, %v512
      %533 = vst.msk [vmem:[#allocation2 + $0x50] sm:$0xff] %vm527, %v514
      %534 = vst.msk [vmem:[#allocation2 + $0x60] sm:$0xff] %vm527, %v516
      %535 = vst.msk [vmem:[#allocation2 + $0x70] sm:$0xff] %vm527, %v518
      %v536 = vld [vmem:[%s244] sm:$0xe]
      %v537 = vld [vmem:[%s244 + $0x4] sm:$0xf]
      %v538 = vld [vmem:[%s244 + $0x8] sm:$0x1]
      %v539 = vld [vmem:[%s244 + $0xc] sm:$0xe]
      %v540 = vld [vmem:[%s244 + $0x10] sm:$0xf]
      %v541 = vld [vmem:[%s244 + $0x14] sm:$0x1]
      %v542 = vld [vmem:[%s244 + $0x18] sm:$0xe]
      %v543 = vld [vmem:[%s244 + $0x1c] sm:$0xf]
      %v544 = vld [vmem:[%s244 + $0x20] sm:$0x1]
      %v545 = vld [vmem:[%s244 + $0x24] sm:$0xe]
      %v546 = vld [vmem:[%s244 + $0x28] sm:$0xf]
      %v547 = vld [vmem:[%s244 + $0x2c] sm:$0x1]
      %v548 = vld [vmem:[%s244 + $0x30] sm:$0xe]
      %v549 = vld [vmem:[%s244 + $0x34] sm:$0xf]
      %v550 = vld [vmem:[%s244 + $0x38] sm:$0x1]
      %v551 = vld [vmem:[%s244 + $0x3c] sm:$0xe]
      %v552 = vld [vmem:[%s244 + $0x40] sm:$0xf]
      %v553 = vld [vmem:[%s244 + $0x44] sm:$0x1]
      %v554 = vld [vmem:[%s244 + $0x48] sm:$0xe]
      %v555 = vld [vmem:[%s244 + $0x4c] sm:$0xf]
      %v556 = vld [vmem:[%s244 + $0x50] sm:$0x1]
      %v557 = vld [vmem:[%s244 + $0x54] sm:$0xe]
      %v558 = vld [vmem:[%s244 + $0x58] sm:$0xf]
      %v559 = vld [vmem:[%s244 + $0x5c] sm:$0x1]
      %v584 = vunpack.c.l.b16 %v536
      %v585 = vunpack.c.l.b16 %v537
      %v586 = vunpack.c.l.b16 %v538
      %v587 = vunpack.c.l.b16 %v539
      %v588 = vunpack.c.l.b16 %v540
      %v589 = vunpack.c.l.b16 %v541
      %v590 = vunpack.c.l.b16 %v542
      %v591 = vunpack.c.l.b16 %v543
      %v592 = vunpack.c.l.b16 %v544
      %v593 = vunpack.c.l.b16 %v545
      %v594 = vunpack.c.l.b16 %v546
      %v595 = vunpack.c.l.b16 %v547
      %v596 = vunpack.c.l.b16 %v548
      %v597 = vunpack.c.l.b16 %v549
      %v598 = vunpack.c.l.b16 %v550
      %v599 = vunpack.c.l.b16 %v551
      %v600 = vunpack.c.l.b16 %v552
      %v601 = vunpack.c.l.b16 %v553
      %v602 = vunpack.c.l.b16 %v554
      %v603 = vunpack.c.l.b16 %v555
      %v604 = vunpack.c.l.b16 %v556
      %v605 = vunpack.c.l.b16 %v557
      %v606 = vunpack.c.l.b16 %v558
      %v607 = vunpack.c.l.b16 %v559
      %v608 = vpack.c.b16 %v585, %v584
      %v609 = vpack.c.b16 %v586, %v586
      %v610 = vpack.c.b16 %v588, %v587
      %v611 = vpack.c.b16 %v589, %v589
      %v612 = vpack.c.b16 %v591, %v590
      %v613 = vpack.c.b16 %v592, %v592
      %v614 = vpack.c.b16 %v594, %v593
      %v615 = vpack.c.b16 %v595, %v595
      %v616 = vpack.c.b16 %v597, %v596
      %v617 = vpack.c.b16 %v598, %v598
      %v618 = vpack.c.b16 %v600, %v599
      %v619 = vpack.c.b16 %v601, %v601
      %v620 = vpack.c.b16 %v603, %v602
      %v621 = vpack.c.b16 %v604, %v604
      %v622 = vpack.c.b16 %v606, %v605
      %v623 = vpack.c.b16 %v607, %v607
      %vm624 = vcmask 1046528
      %v625 = vrot.slane %v608, 1
      %v626 = vrot.slane %v609, 1
      %v627 = vsel %vm624, %v625, %v626
      %v628 = vrot.slane %v610, 1
      %v629 = vrot.slane %v611, 1
      %v630 = vsel %vm624, %v628, %v629
      %v631 = vrot.slane %v612, 1
      %v632 = vrot.slane %v613, 1
      %v633 = vsel %vm624, %v631, %v632
      %v634 = vrot.slane %v614, 1
      %v635 = vrot.slane %v615, 1
      %v636 = vsel %vm624, %v634, %v635
      %v637 = vrot.slane %v616, 1
      %v638 = vrot.slane %v617, 1
      %v639 = vsel %vm624, %v637, %v638
      %v640 = vrot.slane %v618, 1
      %v641 = vrot.slane %v619, 1
      %v642 = vsel %vm624, %v640, %v641
      %v643 = vrot.slane %v620, 1
      %v644 = vrot.slane %v621, 1
      %v645 = vsel %vm624, %v643, %v644
      %v646 = vrot.slane %v622, 1
      %v647 = vrot.slane %v623, 1
      %v648 = vsel %vm624, %v646, %v647
      %649 = vrot.lane.b32.xlu0 %v627, 32
      %v650 = vpop.permute.xlu0 %649
      %651 = vrot.lane.b32.xlu0 %v630, 32
      %v652 = vpop.permute.xlu0 %651
      %653 = vrot.lane.b32.xlu0 %v633, 32
      %v654 = vpop.permute.xlu0 %653
      %655 = vrot.lane.b32.xlu0 %v636, 32
      %v656 = vpop.permute.xlu0 %655
      %657 = vrot.lane.b32.xlu0 %v639, 32
      %v658 = vpop.permute.xlu0 %657
      %659 = vrot.lane.b32.xlu0 %v642, 32
      %v660 = vpop.permute.xlu0 %659
      %661 = vrot.lane.b32.xlu0 %v645, 32
      %v662 = vpop.permute.xlu0 %661
      %663 = vrot.lane.b32.xlu0 %v648, 32
      %v664 = vpop.permute.xlu0 %663
      %vm673 = vcmask 392448
      %674 = vst.msk [vmem:[#allocation2] sm:$0xff] %vm673, %v650
      %675 = vst.msk [vmem:[#allocation2 + $0x10] sm:$0xff] %vm673, %v652
      %676 = vst.msk [vmem:[#allocation2 + $0x20] sm:$0xff] %vm673, %v654
      %677 = vst.msk [vmem:[#allocation2 + $0x30] sm:$0xff] %vm673, %v656
      %678 = vst.msk [vmem:[#allocation2 + $0x40] sm:$0xff] %vm673, %v658
      %679 = vst.msk [vmem:[#allocation2 + $0x50] sm:$0xff] %vm673, %v660
      %680 = vst.msk [vmem:[#allocation2 + $0x60] sm:$0xff] %vm673, %v662
      %681 = vst.msk [vmem:[#allocation2 + $0x70] sm:$0xff] %vm673, %v664
      %s682 = sadd.s32 %s241, 1
      %s683 = smul.u32 %s682, 3
      %s684 = smul.addr %s683, 4
      %s685 = scalar_lea.vmem %s219, %s684
      %v686 = vld [vmem:[%s685] sm:$0xf]
      %v687 = vld [vmem:[%s685 + $0x4] sm:$0xf]
      %v688 = vld [vmem:[%s685 + $0xc] sm:$0xf]
      %v689 = vld [vmem:[%s685 + $0x10] sm:$0xf]
      %v690 = vld [vmem:[%s685 + $0x18] sm:$0xf]
      %v691 = vld [vmem:[%s685 + $0x1c] sm:$0xf]
      %v692 = vld [vmem:[%s685 + $0x24] sm:$0xf]
      %v693 = vld [vmem:[%s685 + $0x28] sm:$0xf]
      %v694 = vld [vmem:[%s685 + $0x30] sm:$0xf]
      %v695 = vld [vmem:[%s685 + $0x34] sm:$0xf]
      %v696 = vld [vmem:[%s685 + $0x3c] sm:$0xf]
      %v697 = vld [vmem:[%s685 + $0x40] sm:$0xf]
      %v698 = vld [vmem:[%s685 + $0x48] sm:$0xf]
      %v699 = vld [vmem:[%s685 + $0x4c] sm:$0xf]
      %v700 = vld [vmem:[%s685 + $0x54] sm:$0xf]
      %v701 = vld [vmem:[%s685 + $0x58] sm:$0xf]
      %v718 = vunpack.c.l.b16 %v686
      %v719 = vunpack.c.l.b16 %v687
      %v720 = vunpack.c.l.b16 %v688
      %v721 = vunpack.c.l.b16 %v689
      %v722 = vunpack.c.l.b16 %v690
      %v723 = vunpack.c.l.b16 %v691
      %v724 = vunpack.c.l.b16 %v692
      %v725 = vunpack.c.l.b16 %v693
      %v726 = vunpack.c.l.b16 %v694
      %v727 = vunpack.c.l.b16 %v695
      %v728 = vunpack.c.l.b16 %v696
      %v729 = vunpack.c.l.b16 %v697
      %v730 = vunpack.c.l.b16 %v698
      %v731 = vunpack.c.l.b16 %v699
      %v732 = vunpack.c.l.b16 %v700
      %v733 = vunpack.c.l.b16 %v701
      %v734 = vpack.c.b16 %v719, %v718
      %v735 = vpack.c.b16 %v721, %v720
      %v736 = vpack.c.b16 %v723, %v722
      %v737 = vpack.c.b16 %v725, %v724
      %v738 = vpack.c.b16 %v727, %v726
      %v739 = vpack.c.b16 %v729, %v728
      %v740 = vpack.c.b16 %v731, %v730
      %v741 = vpack.c.b16 %v733, %v732
      %742 = vrot.lane.b32.xlu0 %v734, 48
      %v743 = vpop.permute.xlu0 %742
      %744 = vrot.lane.b32.xlu0 %v735, 48
      %v745 = vpop.permute.xlu0 %744
      %746 = vrot.lane.b32.xlu0 %v736, 48
      %v747 = vpop.permute.xlu0 %746
      %748 = vrot.lane.b32.xlu0 %v737, 48
      %v749 = vpop.permute.xlu0 %748
      %750 = vrot.lane.b32.xlu0 %v738, 48
      %v751 = vpop.permute.xlu0 %750
      %752 = vrot.lane.b32.xlu0 %v739, 48
      %v753 = vpop.permute.xlu0 %752
      %754 = vrot.lane.b32.xlu0 %v740, 48
      %v755 = vpop.permute.xlu0 %754
      %756 = vrot.lane.b32.xlu0 %v741, 48
      %v757 = vpop.permute.xlu0 %756
      %vm766 = vcmask 523648
      %767 = vst.msk [vmem:[#allocation2] sm:$0xff] %vm766, %v743
      %768 = vst.msk [vmem:[#allocation2 + $0x10] sm:$0xff] %vm766, %v745
      %769 = vst.msk [vmem:[#allocation2 + $0x20] sm:$0xff] %vm766, %v747
      %770 = vst.msk [vmem:[#allocation2 + $0x30] sm:$0xff] %vm766, %v749
      %771 = vst.msk [vmem:[#allocation2 + $0x40] sm:$0xff] %vm766, %v751
      %772 = vst.msk [vmem:[#allocation2 + $0x50] sm:$0xff] %vm766, %v753
      %773 = vst.msk [vmem:[#allocation2 + $0x60] sm:$0xff] %vm766, %v755
      %774 = vst.msk [vmem:[#allocation2 + $0x70] sm:$0xff] %vm766, %v757
      %v775 = vld [vmem:[%s685] sm:$0xf]
      %v776 = vld [vmem:[%s685 + $0x4] sm:$0xf]
      %v777 = vld [vmem:[%s685 + $0x8] sm:$0x1]
      %v778 = vld [vmem:[%s685 + $0xc] sm:$0xf]
      %v779 = vld [vmem:[%s685 + $0x10] sm:$0xf]
      %v780 = vld [vmem:[%s685 + $0x14] sm:$0x1]
      %v781 = vld [vmem:[%s685 + $0x18] sm:$0xf]
      %v782 = vld [vmem:[%s685 + $0x1c] sm:$0xf]
      %v783 = vld [vmem:[%s685 + $0x20] sm:$0x1]
      %v784 = vld [vmem:[%s685 + $0x24] sm:$0xf]
      %v785 = vld [vmem:[%s685 + $0x28] sm:$0xf]
      %v786 = vld [vmem:[%s685 + $0x2c] sm:$0x1]
      %v787 = vld [vmem:[%s685 + $0x30] sm:$0xf]
      %v788 = vld [vmem:[%s685 + $0x34] sm:$0xf]
      %v789 = vld [vmem:[%s685 + $0x38] sm:$0x1]
      %v790 = vld [vmem:[%s685 + $0x3c] sm:$0xf]
      %v791 = vld [vmem:[%s685 + $0x40] sm:$0xf]
      %v792 = vld [vmem:[%s685 + $0x44] sm:$0x1]
      %v793 = vld [vmem:[%s685 + $0x48] sm:$0xf]
      %v794 = vld [vmem:[%s685 + $0x4c] sm:$0xf]
      %v795 = vld [vmem:[%s685 + $0x50] sm:$0x1]
      %v796 = vld [vmem:[%s685 + $0x54] sm:$0xf]
      %v797 = vld [vmem:[%s685 + $0x58] sm:$0xf]
      %v798 = vld [vmem:[%s685 + $0x5c] sm:$0x1]
      %v823 = vunpack.c.l.b16 %v775
      %v824 = vunpack.c.l.b16 %v776
      %v825 = vunpack.c.l.b16 %v777
      %v826 = vunpack.c.l.b16 %v778
      %v827 = vunpack.c.l.b16 %v779
      %v828 = vunpack.c.l.b16 %v780
      %v829 = vunpack.c.l.b16 %v781
      %v830 = vunpack.c.l.b16 %v782
      %v831 = vunpack.c.l.b16 %v783
      %v832 = vunpack.c.l.b16 %v784
      %v833 = vunpack.c.l.b16 %v785
      %v834 = vunpack.c.l.b16 %v786
      %v835 = vunpack.c.l.b16 %v787
      %v836 = vunpack.c.l.b16 %v788
      %v837 = vunpack.c.l.b16 %v789
      %v838 = vunpack.c.l.b16 %v790
      %v839 = vunpack.c.l.b16 %v791
      %v840 = vunpack.c.l.b16 %v792
      %v841 = vunpack.c.l.b16 %v793
      %v842 = vunpack.c.l.b16 %v794
      %v843 = vunpack.c.l.b16 %v795
      %v844 = vunpack.c.l.b16 %v796
      %v845 = vunpack.c.l.b16 %v797
      %v846 = vunpack.c.l.b16 %v798
      %v847 = vpack.c.b16 %v824, %v823
      %v848 = vpack.c.b16 %v825, %v825
      %v849 = vpack.c.b16 %v827, %v826
      %v850 = vpack.c.b16 %v828, %v828
      %v851 = vpack.c.b16 %v830, %v829
      %v852 = vpack.c.b16 %v831, %v831
      %v853 = vpack.c.b16 %v833, %v832
      %v854 = vpack.c.b16 %v834, %v834
      %v855 = vpack.c.b16 %v836, %v835
      %v856 = vpack.c.b16 %v837, %v837
      %v857 = vpack.c.b16 %v839, %v838
      %v858 = vpack.c.b16 %v840, %v840
      %v859 = vpack.c.b16 %v842, %v841
      %v860 = vpack.c.b16 %v843, %v843
      %v861 = vpack.c.b16 %v845, %v844
      %v862 = vpack.c.b16 %v846, %v846
      %v864 = vshrl.u32 %v847, 16
      %v866 = vshll.u32 %v847, 16
      %v868 = vrot.slane %v866, 1
      %v869 = vor.u32 %v864, %v868
      %v871 = vshll.u32 %v848, 16
      %v873 = vrot.slane %v871, 1
      %v874 = vsel %vm406, %v869, %v873
      %v876 = vshrl.u32 %v849, 16
      %v878 = vshll.u32 %v849, 16
      %v880 = vrot.slane %v878, 1
      %v881 = vor.u32 %v876, %v880
      %v883 = vshll.u32 %v850, 16
      %v885 = vrot.slane %v883, 1
      %v886 = vsel %vm406, %v881, %v885
      %v888 = vshrl.u32 %v851, 16
      %v890 = vshll.u32 %v851, 16
      %v892 = vrot.slane %v890, 1
      %v893 = vor.u32 %v888, %v892
      %v895 = vshll.u32 %v852, 16
      %v897 = vrot.slane %v895, 1
      %v898 = vsel %vm406, %v893, %v897
      %v900 = vshrl.u32 %v853, 16
      %v902 = vshll.u32 %v853, 16
      %v904 = vrot.slane %v902, 1
      %v905 = vor.u32 %v900, %v904
      %v907 = vshll.u32 %v854, 16
      %v909 = vrot.slane %v907, 1
      %v910 = vsel %vm406, %v905, %v909
      %v912 = vshrl.u32 %v855, 16
      %v914 = vshll.u32 %v855, 16
      %v916 = vrot.slane %v914, 1
      %v917 = vor.u32 %v912, %v916
      %v919 = vshll.u32 %v856, 16
      %v921 = vrot.slane %v919, 1
      %v922 = vsel %vm406, %v917, %v921
      %v924 = vshrl.u32 %v857, 16
      %v926 = vshll.u32 %v857, 16
      %v928 = vrot.slane %v926, 1
      %v929 = vor.u32 %v924, %v928
      %v931 = vshll.u32 %v858, 16
      %v933 = vrot.slane %v931, 1
      %v934 = vsel %vm406, %v929, %v933
      %v936 = vshrl.u32 %v859, 16
      %v938 = vshll.u32 %v859, 16
      %v940 = vrot.slane %v938, 1
      %v941 = vor.u32 %v936, %v940
      %v943 = vshll.u32 %v860, 16
      %v945 = vrot.slane %v943, 1
      %v946 = vsel %vm406, %v941, %v945
      %v948 = vshrl.u32 %v861, 16
      %v950 = vshll.u32 %v861, 16
      %v952 = vrot.slane %v950, 1
      %v953 = vor.u32 %v948, %v952
      %v955 = vshll.u32 %v862, 16
      %v957 = vrot.slane %v955, 1
      %v958 = vsel %vm406, %v953, %v957
      %959 = vrot.lane.b32.xlu0 %v874, 64
      %v960 = vpop.permute.xlu0 %959
      %961 = vrot.lane.b32.xlu0 %v886, 64
      %v962 = vpop.permute.xlu0 %961
      %963 = vrot.lane.b32.xlu0 %v898, 64
      %v964 = vpop.permute.xlu0 %963
      %965 = vrot.lane.b32.xlu0 %v910, 64
      %v966 = vpop.permute.xlu0 %965
      %967 = vrot.lane.b32.xlu0 %v922, 64
      %v968 = vpop.permute.xlu0 %967
      %969 = vrot.lane.b32.xlu0 %v934, 64
      %v970 = vpop.permute.xlu0 %969
      %971 = vrot.lane.b32.xlu0 %v946, 64
      %v972 = vpop.permute.xlu0 %971
      %973 = vrot.lane.b32.xlu0 %v958, 64
      %v974 = vpop.permute.xlu0 %973
      %vm983 = vcmask 654848
      %984 = vst.msk [vmem:[#allocation2] sm:$0xff] %vm983, %v960
      %985 = vst.msk [vmem:[#allocation2 + $0x10] sm:$0xff] %vm983, %v962
      %986 = vst.msk [vmem:[#allocation2 + $0x20] sm:$0xff] %vm983, %v964
      %987 = vst.msk [vmem:[#allocation2 + $0x30] sm:$0xff] %vm983, %v966
      %988 = vst.msk [vmem:[#allocation2 + $0x40] sm:$0xff] %vm983, %v968
      %989 = vst.msk [vmem:[#allocation2 + $0x50] sm:$0xff] %vm983, %v970
      %990 = vst.msk [vmem:[#allocation2 + $0x60] sm:$0xff] %vm983, %v972
      %991 = vst.msk [vmem:[#allocation2 + $0x70] sm:$0xff] %vm983, %v974
      %v992 = vld [vmem:[%s685] sm:$0xe]
      %v993 = vld [vmem:[%s685 + $0x4] sm:$0xf]
      %v994 = vld [vmem:[%s685 + $0x8] sm:$0x1]
      %v995 = vld [vmem:[%s685 + $0xc] sm:$0xe]
      %v996 = vld [vmem:[%s685 + $0x10] sm:$0xf]
      %v997 = vld [vmem:[%s685 + $0x14] sm:$0x1]
      %v998 = vld [vmem:[%s685 + $0x18] sm:$0xe]
      %v999 = vld [vmem:[%s685 + $0x1c] sm:$0xf]
      %v1000 = vld [vmem:[%s685 + $0x20] sm:$0x1]
      %v1001 = vld [vmem:[%s685 + $0x24] sm:$0xe]
      %v1002 = vld [vmem:[%s685 + $0x28] sm:$0xf]
      %v1003 = vld [vmem:[%s685 + $0x2c] sm:$0x1]
      %v1004 = vld [vmem:[%s685 + $0x30] sm:$0xe]
      %v1005 = vld [vmem:[%s685 + $0x34] sm:$0xf]
      %v1006 = vld [vmem:[%s685 + $0x38] sm:$0x1]
      %v1007 = vld [vmem:[%s685 + $0x3c] sm:$0xe]
      %v1008 = vld [vmem:[%s685 + $0x40] sm:$0xf]
      %v1009 = vld [vmem:[%s685 + $0x44] sm:$0x1]
      %v1010 = vld [vmem:[%s685 + $0x48] sm:$0xe]
      %v1011 = vld [vmem:[%s685 + $0x4c] sm:$0xf]
      %v1012 = vld [vmem:[%s685 + $0x50] sm:$0x1]
      %v1013 = vld [vmem:[%s685 + $0x54] sm:$0xe]
      %v1014 = vld [vmem:[%s685 + $0x58] sm:$0xf]
      %v1015 = vld [vmem:[%s685 + $0x5c] sm:$0x1]
      %v1040 = vunpack.c.l.b16 %v992
      %v1041 = vunpack.c.l.b16 %v993
      %v1042 = vunpack.c.l.b16 %v994
      %v1043 = vunpack.c.l.b16 %v995
      %v1044 = vunpack.c.l.b16 %v996
      %v1045 = vunpack.c.l.b16 %v997
      %v1046 = vunpack.c.l.b16 %v998
      %v1047 = vunpack.c.l.b16 %v999
      %v1048 = vunpack.c.l.b16 %v1000
      %v1049 = vunpack.c.l.b16 %v1001
      %v1050 = vunpack.c.l.b16 %v1002
      %v1051 = vunpack.c.l.b16 %v1003
      %v1052 = vunpack.c.l.b16 %v1004
      %v1053 = vunpack.c.l.b16 %v1005
      %v1054 = vunpack.c.l.b16 %v1006
      %v1055 = vunpack.c.l.b16 %v1007
      %v1056 = vunpack.c.l.b16 %v1008
      %v1057 = vunpack.c.l.b16 %v1009
      %v1058 = vunpack.c.l.b16 %v1010
      %v1059 = vunpack.c.l.b16 %v1011
      %v1060 = vunpack.c.l.b16 %v1012
      %v1061 = vunpack.c.l.b16 %v1013
      %v1062 = vunpack.c.l.b16 %v1014
      %v1063 = vunpack.c.l.b16 %v1015
      %v1064 = vpack.c.b16 %v1041, %v1040
      %v1065 = vpack.c.b16 %v1042, %v1042
      %v1066 = vpack.c.b16 %v1044, %v1043
      %v1067 = vpack.c.b16 %v1045, %v1045
      %v1068 = vpack.c.b16 %v1047, %v1046
      %v1069 = vpack.c.b16 %v1048, %v1048
      %v1070 = vpack.c.b16 %v1050, %v1049
      %v1071 = vpack.c.b16 %v1051, %v1051
      %v1072 = vpack.c.b16 %v1053, %v1052
      %v1073 = vpack.c.b16 %v1054, %v1054
      %v1074 = vpack.c.b16 %v1056, %v1055
      %v1075 = vpack.c.b16 %v1057, %v1057
      %v1076 = vpack.c.b16 %v1059, %v1058
      %v1077 = vpack.c.b16 %v1060, %v1060
      %v1078 = vpack.c.b16 %v1062, %v1061
      %v1079 = vpack.c.b16 %v1063, %v1063
      %v1080 = vrot.slane %v1064, 1
      %v1081 = vrot.slane %v1065, 1
      %v1082 = vsel %vm624, %v1080, %v1081
      %v1083 = vrot.slane %v1066, 1
      %v1084 = vrot.slane %v1067, 1
      %v1085 = vsel %vm624, %v1083, %v1084
      %v1086 = vrot.slane %v1068, 1
      %v1087 = vrot.slane %v1069, 1
      %v1088 = vsel %vm624, %v1086, %v1087
      %v1089 = vrot.slane %v1070, 1
      %v1090 = vrot.slane %v1071, 1
      %v1091 = vsel %vm624, %v1089, %v1090
      %v1092 = vrot.slane %v1072, 1
      %v1093 = vrot.slane %v1073, 1
      %v1094 = vsel %vm624, %v1092, %v1093
      %v1095 = vrot.slane %v1074, 1
      %v1096 = vrot.slane %v1075, 1
      %v1097 = vsel %vm624, %v1095, %v1096
      %v1098 = vrot.slane %v1076, 1
      %v1099 = vrot.slane %v1077, 1
      %v1100 = vsel %vm624, %v1098, %v1099
      %v1101 = vrot.slane %v1078, 1
      %v1102 = vrot.slane %v1079, 1
      %v1103 = vsel %vm624, %v1101, %v1102
      %1104 = vrot.lane.b32.xlu0 %v1082, 80
      %v1105 = vpop.permute.xlu0 %1104
      %1106 = vrot.lane.b32.xlu0 %v1085, 80
      %v1107 = vpop.permute.xlu0 %1106
      %1108 = vrot.lane.b32.xlu0 %v1088, 80
      %v1109 = vpop.permute.xlu0 %1108
      %1110 = vrot.lane.b32.xlu0 %v1091, 80
      %v1111 = vpop.permute.xlu0 %1110
      %1112 = vrot.lane.b32.xlu0 %v1094, 80
      %v1113 = vpop.permute.xlu0 %1112
      %1114 = vrot.lane.b32.xlu0 %v1097, 80
      %v1115 = vpop.permute.xlu0 %1114
      %1116 = vrot.lane.b32.xlu0 %v1100, 80
      %v1117 = vpop.permute.xlu0 %1116
      %1118 = vrot.lane.b32.xlu0 %v1103, 80
      %v1119 = vpop.permute.xlu0 %1118
      %vm1128 = vcmask 786048
      %1129 = vst.msk [vmem:[#allocation2] sm:$0xff] %vm1128, %v1105
      %1130 = vst.msk [vmem:[#allocation2 + $0x10] sm:$0xff] %vm1128, %v1107
      %1131 = vst.msk [vmem:[#allocation2 + $0x20] sm:$0xff] %vm1128, %v1109
      %1132 = vst.msk [vmem:[#allocation2 + $0x30] sm:$0xff] %vm1128, %v1111
      %1133 = vst.msk [vmem:[#allocation2 + $0x40] sm:$0xff] %vm1128, %v1113
      %1134 = vst.msk [vmem:[#allocation2 + $0x50] sm:$0xff] %vm1128, %v1115
      %1135 = vst.msk [vmem:[#allocation2 + $0x60] sm:$0xff] %vm1128, %v1117
      %1136 = vst.msk [vmem:[#allocation2 + $0x70] sm:$0xff] %vm1128, %v1119
      %s1137 = sadd.s32 %s241, 2
      %s1138 = smul.u32 %s1137, 3
      %s1139 = smul.addr %s1138, 4
      %s1140 = scalar_lea.vmem %s219, %s1139
      %v1141 = vld [vmem:[%s1140] sm:$0xf]
      %v1142 = vld [vmem:[%s1140 + $0x4] sm:$0xf]
      %v1143 = vld [vmem:[%s1140 + $0xc] sm:$0xf]
      %v1144 = vld [vmem:[%s1140 + $0x10] sm:$0xf]
      %v1145 = vld [vmem:[%s1140 + $0x18] sm:$0xf]
      %v1146 = vld [vmem:[%s1140 + $0x1c] sm:$0xf]
      %v1147 = vld [vmem:[%s1140 + $0x24] sm:$0xf]
      %v1148 = vld [vmem:[%s1140 + $0x28] sm:$0xf]
      %v1149 = vld [vmem:[%s1140 + $0x30] sm:$0xf]
      %v1150 = vld [vmem:[%s1140 + $0x34] sm:$0xf]
      %v1151 = vld [vmem:[%s1140 + $0x3c] sm:$0xf]
      %v1152 = vld [vmem:[%s1140 + $0x40] sm:$0xf]
      %v1153 = vld [vmem:[%s1140 + $0x48] sm:$0xf]
      %v1154 = vld [vmem:[%s1140 + $0x4c] sm:$0xf]
      %v1155 = vld [vmem:[%s1140 + $0x54] sm:$0xf]
      %v1156 = vld [vmem:[%s1140 + $0x58] sm:$0xf]
      %v1173 = vunpack.c.l.b16 %v1141
      %v1174 = vunpack.c.l.b16 %v1142
      %v1175 = vunpack.c.l.b16 %v1143
      %v1176 = vunpack.c.l.b16 %v1144
      %v1177 = vunpack.c.l.b16 %v1145
      %v1178 = vunpack.c.l.b16 %v1146
      %v1179 = vunpack.c.l.b16 %v1147
      %v1180 = vunpack.c.l.b16 %v1148
      %v1181 = vunpack.c.l.b16 %v1149
      %v1182 = vunpack.c.l.b16 %v1150
      %v1183 = vunpack.c.l.b16 %v1151
      %v1184 = vunpack.c.l.b16 %v1152
      %v1185 = vunpack.c.l.b16 %v1153
      %v1186 = vunpack.c.l.b16 %v1154
      %v1187 = vunpack.c.l.b16 %v1155
      %v1188 = vunpack.c.l.b16 %v1156
      %v1189 = vpack.c.b16 %v1174, %v1173
      %v1190 = vpack.c.b16 %v1176, %v1175
      %v1191 = vpack.c.b16 %v1178, %v1177
      %v1192 = vpack.c.b16 %v1180, %v1179
      %v1193 = vpack.c.b16 %v1182, %v1181
      %v1194 = vpack.c.b16 %v1184, %v1183
      %v1195 = vpack.c.b16 %v1186, %v1185
      %v1196 = vpack.c.b16 %v1188, %v1187
      %1197 = vrot.lane.b32.xlu0 %v1189, 96
      %v1198 = vpop.permute.xlu0 %1197
      %1199 = vrot.lane.b32.xlu0 %v1190, 96
      %v1200 = vpop.permute.xlu0 %1199
      %1201 = vrot.lane.b32.xlu0 %v1191, 96
      %v1202 = vpop.permute.xlu0 %1201
      %1203 = vrot.lane.b32.xlu0 %v1192, 96
      %v1204 = vpop.permute.xlu0 %1203
      %1205 = vrot.lane.b32.xlu0 %v1193, 96
      %v1206 = vpop.permute.xlu0 %1205
      %1207 = vrot.lane.b32.xlu0 %v1194, 96
      %v1208 = vpop.permute.xlu0 %1207
      %1209 = vrot.lane.b32.xlu0 %v1195, 96
      %v1210 = vpop.permute.xlu0 %1209
      %1211 = vrot.lane.b32.xlu0 %v1196, 96
      %v1212 = vpop.permute.xlu0 %1211
      %vm1221 = vcmask 917248
      %1222 = vst.msk [vmem:[#allocation2] sm:$0xff] %vm1221, %v1198
      %1223 = vst.msk [vmem:[#allocation2 + $0x10] sm:$0xff] %vm1221, %v1200
      %1224 = vst.msk [vmem:[#allocation2 + $0x20] sm:$0xff] %vm1221, %v1202
      %1225 = vst.msk [vmem:[#allocation2 + $0x30] sm:$0xff] %vm1221, %v1204
      %1226 = vst.msk [vmem:[#allocation2 + $0x40] sm:$0xff] %vm1221, %v1206
      %1227 = vst.msk [vmem:[#allocation2 + $0x50] sm:$0xff] %vm1221, %v1208
      %1228 = vst.msk [vmem:[#allocation2 + $0x60] sm:$0xff] %vm1221, %v1210
      %1229 = vst.msk [vmem:[#allocation2 + $0x70] sm:$0xff] %vm1221, %v1212
      %v1230 = vld [vmem:[%s1140] sm:$0xf]
      %v1231 = vld [vmem:[%s1140 + $0x4] sm:$0xf]
      %v1232 = vld [vmem:[%s1140 + $0x8] sm:$0x1]
      %v1233 = vld [vmem:[%s1140 + $0xc] sm:$0xf]
      %v1234 = vld [vmem:[%s1140 + $0x10] sm:$0xf]
      %v1235 = vld [vmem:[%s1140 + $0x14] sm:$0x1]
      %v1236 = vld [vmem:[%s1140 + $0x18] sm:$0xf]
      %v1237 = vld [vmem:[%s1140 + $0x1c] sm:$0xf]
      %v1238 = vld [vmem:[%s1140 + $0x20] sm:$0x1]
      %v1239 = vld [vmem:[%s1140 + $0x24] sm:$0xf]
      %v1240 = vld [vmem:[%s1140 + $0x28] sm:$0xf]
      %v1241 = vld [vmem:[%s1140 + $0x2c] sm:$0x1]
      %v1242 = vld [vmem:[%s1140 + $0x30] sm:$0xf]
      %v1243 = vld [vmem:[%s1140 + $0x34] sm:$0xf]
      %v1244 = vld [vmem:[%s1140 + $0x38] sm:$0x1]
      %v1245 = vld [vmem:[%s1140 + $0x3c] sm:$0xf]
      %v1246 = vld [vmem:[%s1140 + $0x40] sm:$0xf]
      %v1247 = vld [vmem:[%s1140 + $0x44] sm:$0x1]
      %v1248 = vld [vmem:[%s1140 + $0x48] sm:$0xf]
      %v1249 = vld [vmem:[%s1140 + $0x4c] sm:$0xf]
      %v1250 = vld [vmem:[%s1140 + $0x50] sm:$0x1]
      %v1251 = vld [vmem:[%s1140 + $0x54] sm:$0xf]
      %v1252 = vld [vmem:[%s1140 + $0x58] sm:$0xf]
      %v1253 = vld [vmem:[%s1140 + $0x5c] sm:$0x1]
      %v1278 = vunpack.c.l.b16 %v1230
      %v1279 = vunpack.c.l.b16 %v1231
      %v1280 = vunpack.c.l.b16 %v1232
      %v1281 = vunpack.c.l.b16 %v1233
      %v1282 = vunpack.c.l.b16 %v1234
      %v1283 = vunpack.c.l.b16 %v1235
      %v1284 = vunpack.c.l.b16 %v1236
      %v1285 = vunpack.c.l.b16 %v1237
      %v1286 = vunpack.c.l.b16 %v1238
      %v1287 = vunpack.c.l.b16 %v1239
      %v1288 = vunpack.c.l.b16 %v1240
      %v1289 = vunpack.c.l.b16 %v1241
      %v1290 = vunpack.c.l.b16 %v1242
      %v1291 = vunpack.c.l.b16 %v1243
      %v1292 = vunpack.c.l.b16 %v1244
      %v1293 = vunpack.c.l.b16 %v1245
      %v1294 = vunpack.c.l.b16 %v1246
      %v1295 = vunpack.c.l.b16 %v1247
      %v1296 = vunpack.c.l.b16 %v1248
      %v1297 = vunpack.c.l.b16 %v1249
      %v1298 = vunpack.c.l.b16 %v1250
      %v1299 = vunpack.c.l.b16 %v1251
      %v1300 = vunpack.c.l.b16 %v1252
      %v1301 = vunpack.c.l.b16 %v1253
      %v1302 = vpack.c.b16 %v1279, %v1278
      %v1303 = vpack.c.b16 %v1280, %v1280
      %v1304 = vpack.c.b16 %v1282, %v1281
      %v1305 = vpack.c.b16 %v1283, %v1283
      %v1306 = vpack.c.b16 %v1285, %v1284
      %v1307 = vpack.c.b16 %v1286, %v1286
      %v1308 = vpack.c.b16 %v1288, %v1287
      %v1309 = vpack.c.b16 %v1289, %v1289
      %v1310 = vpack.c.b16 %v1291, %v1290
      %v1311 = vpack.c.b16 %v1292, %v1292
      %v1312 = vpack.c.b16 %v1294, %v1293
      %v1313 = vpack.c.b16 %v1295, %v1295
      %v1314 = vpack.c.b16 %v1297, %v1296
      %v1315 = vpack.c.b16 %v1298, %v1298
      %v1316 = vpack.c.b16 %v1300, %v1299
      %v1317 = vpack.c.b16 %v1301, %v1301
      %v1319 = vshrl.u32 %v1302, 16
      %v1321 = vshll.u32 %v1302, 16
      %v1323 = vrot.slane %v1321, 1
      %v1324 = vor.u32 %v1319, %v1323
      %v1326 = vshll.u32 %v1303, 16
      %v1328 = vrot.slane %v1326, 1
      %v1329 = vsel %vm406, %v1324, %v1328
      %v1331 = vshrl.u32 %v1304, 16
      %v1333 = vshll.u32 %v1304, 16
      %v1335 = vrot.slane %v1333, 1
      %v1336 = vor.u32 %v1331, %v1335
      %v1338 = vshll.u32 %v1305, 16
      %v1340 = vrot.slane %v1338, 1
      %v1341 = vsel %vm406, %v1336, %v1340
      %v1343 = vshrl.u32 %v1306, 16
      %v1345 = vshll.u32 %v1306, 16
      %v1347 = vrot.slane %v1345, 1
      %v1348 = vor.u32 %v1343, %v1347
      %v1350 = vshll.u32 %v1307, 16
      %v1352 = vrot.slane %v1350, 1
      %v1353 = vsel %vm406, %v1348, %v1352
      %v1355 = vshrl.u32 %v1308, 16
      %v1357 = vshll.u32 %v1308, 16
      %v1359 = vrot.slane %v1357, 1
      %v1360 = vor.u32 %v1355, %v1359
      %v1362 = vshll.u32 %v1309, 16
      %v1364 = vrot.slane %v1362, 1
      %v1365 = vsel %vm406, %v1360, %v1364
      %v1367 = vshrl.u32 %v1310, 16
      %v1369 = vshll.u32 %v1310, 16
      %v1371 = vrot.slane %v1369, 1
      %v1372 = vor.u32 %v1367, %v1371
      %v1374 = vshll.u32 %v1311, 16
      %v1376 = vrot.slane %v1374, 1
      %v1377 = vsel %vm406, %v1372, %v1376
      %v1379 = vshrl.u32 %v1312, 16
      %v1381 = vshll.u32 %v1312, 16
      %v1383 = vrot.slane %v1381, 1
      %v1384 = vor.u32 %v1379, %v1383
      %v1386 = vshll.u32 %v1313, 16
      %v1388 = vrot.slane %v1386, 1
      %v1389 = vsel %vm406, %v1384, %v1388
      %v1391 = vshrl.u32 %v1314, 16
      %v1393 = vshll.u32 %v1314, 16
      %v1395 = vrot.slane %v1393, 1
      %v1396 = vor.u32 %v1391, %v1395
      %v1398 = vshll.u32 %v1315, 16
      %v1400 = vrot.slane %v1398, 1
      %v1401 = vsel %vm406, %v1396, %v1400
      %v1403 = vshrl.u32 %v1316, 16
      %v1405 = vshll.u32 %v1316, 16
      %v1407 = vrot.slane %v1405, 1
      %v1408 = vor.u32 %v1403, %v1407
      %v1410 = vshll.u32 %v1317, 16
      %v1412 = vrot.slane %v1410, 1
      %v1413 = vsel %vm406, %v1408, %v1412
      %1414 = vrot.lane.b32.xlu0 %v1329, 112
      %v1415 = vpop.permute.xlu0 %1414
      %1416 = vrot.lane.b32.xlu0 %v1341, 112
      %v1417 = vpop.permute.xlu0 %1416
      %1418 = vrot.lane.b32.xlu0 %v1353, 112
      %v1419 = vpop.permute.xlu0 %1418
      %1420 = vrot.lane.b32.xlu0 %v1365, 112
      %v1421 = vpop.permute.xlu0 %1420
      %1422 = vrot.lane.b32.xlu0 %v1377, 112
      %v1423 = vpop.permute.xlu0 %1422
      %1424 = vrot.lane.b32.xlu0 %v1389, 112
      %v1425 = vpop.permute.xlu0 %1424
      %1426 = vrot.lane.b32.xlu0 %v1401, 112
      %v1427 = vpop.permute.xlu0 %1426
      %1428 = vrot.lane.b32.xlu0 %v1413, 112
      %v1429 = vpop.permute.xlu0 %1428
      %vm1438 = vcmask 1048448
      %1439 = vst.msk [vmem:[#allocation2] sm:$0xff] %vm1438, %v1415
      %1440 = vst.msk [vmem:[#allocation2 + $0x10] sm:$0xff] %vm1438, %v1417
      %1441 = vst.msk [vmem:[#allocation2 + $0x20] sm:$0xff] %vm1438, %v1419
      %1442 = vst.msk [vmem:[#allocation2 + $0x30] sm:$0xff] %vm1438, %v1421
      %1443 = vst.msk [vmem:[#allocation2 + $0x40] sm:$0xff] %vm1438, %v1423
      %1444 = vst.msk [vmem:[#allocation2 + $0x50] sm:$0xff] %vm1438, %v1425
      %1445 = vst.msk [vmem:[#allocation2 + $0x60] sm:$0xff] %vm1438, %v1427
      %1446 = vst.msk [vmem:[#allocation2 + $0x70] sm:$0xff] %vm1438, %v1429
      %v1447 = vld [vmem:[%s1140] sm:$0xe]
      %v1448 = vld [vmem:[%s1140 + $0x4] sm:$0xf]
      %v1449 = vld [vmem:[%s1140 + $0x8] sm:$0x1]
      %v1450 = vld [vmem:[%s1140 + $0xc] sm:$0xe]
      %v1451 = vld [vmem:[%s1140 + $0x10] sm:$0xf]
      %v1452 = vld [vmem:[%s1140 + $0x14] sm:$0x1]
      %v1453 = vld [vmem:[%s1140 + $0x18] sm:$0xe]
      %v1454 = vld [vmem:[%s1140 + $0x1c] sm:$0xf]
      %v1455 = vld [vmem:[%s1140 + $0x20] sm:$0x1]
      %v1456 = vld [vmem:[%s1140 + $0x24] sm:$0xe]
      %v1457 = vld [vmem:[%s1140 + $0x28] sm:$0xf]
      %v1458 = vld [vmem:[%s1140 + $0x2c] sm:$0x1]
      %v1459 = vld [vmem:[%s1140 + $0x30] sm:$0xe]
      %v1460 = vld [vmem:[%s1140 + $0x34] sm:$0xf]
      %v1461 = vld [vmem:[%s1140 + $0x38] sm:$0x1]
      %v1462 = vld [vmem:[%s1140 + $0x3c] sm:$0xe]
      %v1463 = vld [vmem:[%s1140 + $0x40] sm:$0xf]
      %v1464 = vld [vmem:[%s1140 + $0x44] sm:$0x1]
      %v1465 = vld [vmem:[%s1140 + $0x48] sm:$0xe]
      %v1466 = vld [vmem:[%s1140 + $0x4c] sm:$0xf]
      %v1467 = vld [vmem:[%s1140 + $0x50] sm:$0x1]
      %v1468 = vld [vmem:[%s1140 + $0x54] sm:$0xe]
      %v1469 = vld [vmem:[%s1140 + $0x58] sm:$0xf]
      %v1470 = vld [vmem:[%s1140 + $0x5c] sm:$0x1]
      %v1495 = vunpack.c.l.b16 %v1447
      %v1496 = vunpack.c.l.b16 %v1448
      %v1497 = vunpack.c.l.b16 %v1449
      %v1498 = vunpack.c.l.b16 %v1450
      %v1499 = vunpack.c.l.b16 %v1451
      %v1500 = vunpack.c.l.b16 %v1452
      %v1501 = vunpack.c.l.b16 %v1453
      %v1502 = vunpack.c.l.b16 %v1454
      %v1503 = vunpack.c.l.b16 %v1455
      %v1504 = vunpack.c.l.b16 %v1456
      %v1505 = vunpack.c.l.b16 %v1457
      %v1506 = vunpack.c.l.b16 %v1458
      %v1507 = vunpack.c.l.b16 %v1459
      %v1508 = vunpack.c.l.b16 %v1460
      %v1509 = vunpack.c.l.b16 %v1461
      %v1510 = vunpack.c.l.b16 %v1462
      %v1511 = vunpack.c.l.b16 %v1463
      %v1512 = vunpack.c.l.b16 %v1464
      %v1513 = vunpack.c.l.b16 %v1465
      %v1514 = vunpack.c.l.b16 %v1466
      %v1515 = vunpack.c.l.b16 %v1467
      %v1516 = vunpack.c.l.b16 %v1468
      %v1517 = vunpack.c.l.b16 %v1469
      %v1518 = vunpack.c.l.b16 %v1470
      %v1519 = vpack.c.b16 %v1496, %v1495
      %v1520 = vpack.c.b16 %v1497, %v1497
      %v1521 = vpack.c.b16 %v1499, %v1498
      %v1522 = vpack.c.b16 %v1500, %v1500
      %v1523 = vpack.c.b16 %v1502, %v1501
      %v1524 = vpack.c.b16 %v1503, %v1503
      %v1525 = vpack.c.b16 %v1505, %v1504
      %v1526 = vpack.c.b16 %v1506, %v1506
      %v1527 = vpack.c.b16 %v1508, %v1507
      %v1528 = vpack.c.b16 %v1509, %v1509
      %v1529 = vpack.c.b16 %v1511, %v1510
      %v1530 = vpack.c.b16 %v1512, %v1512
      %v1531 = vpack.c.b16 %v1514, %v1513
      %v1532 = vpack.c.b16 %v1515, %v1515
      %v1533 = vpack.c.b16 %v1517, %v1516
      %v1534 = vpack.c.b16 %v1518, %v1518
      %v1535 = vrot.slane %v1519, 1
      %v1536 = vrot.slane %v1520, 1
      %v1537 = vsel %vm624, %v1535, %v1536
      %v1538 = vrot.slane %v1521, 1
      %v1539 = vrot.slane %v1522, 1
      %v1540 = vsel %vm624, %v1538, %v1539
      %v1541 = vrot.slane %v1523, 1
      %v1542 = vrot.slane %v1524, 1
      %v1543 = vsel %vm624, %v1541, %v1542
      %v1544 = vrot.slane %v1525, 1
      %v1545 = vrot.slane %v1526, 1
      %v1546 = vsel %vm624, %v1544, %v1545
      %v1547 = vrot.slane %v1527, 1
      %v1548 = vrot.slane %v1528, 1
      %v1549 = vsel %vm624, %v1547, %v1548
      %v1550 = vrot.slane %v1529, 1
      %v1551 = vrot.slane %v1530, 1
      %v1552 = vsel %vm624, %v1550, %v1551
      %v1553 = vrot.slane %v1531, 1
      %v1554 = vrot.slane %v1532, 1
      %v1555 = vsel %vm624, %v1553, %v1554
      %v1556 = vrot.slane %v1533, 1
      %v1557 = vrot.slane %v1534, 1
      %v1558 = vsel %vm624, %v1556, %v1557
      %1567 = vst.msk [vmem:[#allocation2 + $0x8] sm:$0xff] %vm309, %v1537
      %1568 = vst.msk [vmem:[#allocation2 + $0x18] sm:$0xff] %vm309, %v1540
      %1569 = vst.msk [vmem:[#allocation2 + $0x28] sm:$0xff] %vm309, %v1543
      %1570 = vst.msk [vmem:[#allocation2 + $0x38] sm:$0xff] %vm309, %v1546
      %1571 = vst.msk [vmem:[#allocation2 + $0x48] sm:$0xff] %vm309, %v1549
      %1572 = vst.msk [vmem:[#allocation2 + $0x58] sm:$0xff] %vm309, %v1552
      %1573 = vst.msk [vmem:[#allocation2 + $0x68] sm:$0xff] %vm309, %v1555
      %1574 = vst.msk [vmem:[#allocation2 + $0x78] sm:$0xff] %vm309, %v1558
      %v1575 = vld [vmem:[#allocation2] sm:$0xff]
      %v1576 = vld [vmem:[#allocation2 + $0x8] sm:$0xff]
      %v1577 = vld [vmem:[#allocation2 + $0x10] sm:$0xff]
      %v1578 = vld [vmem:[#allocation2 + $0x18] sm:$0xff]
      %v1579 = vld [vmem:[#allocation2 + $0x20] sm:$0xff]
      %v1580 = vld [vmem:[#allocation2 + $0x28] sm:$0xff]
      %v1581 = vld [vmem:[#allocation2 + $0x30] sm:$0xff]
      %v1582 = vld [vmem:[#allocation2 + $0x38] sm:$0xff]
      %v1583 = vld [vmem:[#allocation2 + $0x40] sm:$0xff]
      %v1584 = vld [vmem:[#allocation2 + $0x48] sm:$0xff]
      %v1585 = vld [vmem:[#allocation2 + $0x50] sm:$0xff]
      %v1586 = vld [vmem:[#allocation2 + $0x58] sm:$0xff]
      %v1587 = vld [vmem:[#allocation2 + $0x60] sm:$0xff]
      %v1588 = vld [vmem:[#allocation2 + $0x68] sm:$0xff]
      %v1589 = vld [vmem:[#allocation2 + $0x70] sm:$0xff]
      %v1590 = vld [vmem:[#allocation2 + $0x78] sm:$0xff]
      %v1591 = vld [vmem:[%s223] sm:$0xf]
      %v1592 = vld [vmem:[%s223 + $0x4] sm:$0xf]
      %v1593 = vld [vmem:[%s223 + $0x8] sm:$0xf]
      %v1594 = vld [vmem:[%s223 + $0xc] sm:$0xf]
      %v1595 = vld [vmem:[%s223 + $0x10] sm:$0xf]
      %v1596 = vld [vmem:[%s223 + $0x14] sm:$0xf]
      %v1597 = vld [vmem:[%s223 + $0x18] sm:$0xf]
      %v1598 = vld [vmem:[%s223 + $0x1c] sm:$0xf]
      %v1599 = vld [vmem:[%s223 + $0x20] sm:$0xf]
      %v1600 = vld [vmem:[%s223 + $0x24] sm:$0xf]
      %v1601 = vld [vmem:[%s223 + $0x28] sm:$0xf]
      %v1602 = vld [vmem:[%s223 + $0x2c] sm:$0xf]
      %v1603 = vld [vmem:[%s223 + $0x30] sm:$0xf]
      %v1604 = vld [vmem:[%s223 + $0x34] sm:$0xf]
      %v1605 = vld [vmem:[%s223 + $0x38] sm:$0xf]
      %v1606 = vld [vmem:[%s223 + $0x3c] sm:$0xf]
      %v1607 = vld [vmem:[%s223 + $0x40] sm:$0xf]
      %v1608 = vld [vmem:[%s223 + $0x44] sm:$0xf]
      %v1609 = vld [vmem:[%s226] sm:$0x1]
      %v1611 = vlaneseq
      %v1612 = vshrl.u32 %v1611, 7
      %v1613 = vsub.s32 0, %v1612
      %v1614 = vrot.slane %v1609, %v1613
      %v1634 = vunpack.c.l.b16 %v1591
      %v1635 = vunpack.c.l.b16 %v1592
      %v1636 = vunpack.c.l.b16 %v1593
      %v1637 = vunpack.c.l.b16 %v1594
      %v1638 = vunpack.c.l.b16 %v1595
      %v1639 = vunpack.c.l.b16 %v1596
      %v1640 = vunpack.c.l.b16 %v1597
      %v1641 = vunpack.c.l.b16 %v1598
      %v1642 = vunpack.c.l.b16 %v1599
      %v1643 = vunpack.c.l.b16 %v1600
      %v1644 = vunpack.c.l.b16 %v1601
      %v1645 = vunpack.c.l.b16 %v1602
      %v1646 = vunpack.c.l.b16 %v1603
      %v1647 = vunpack.c.l.b16 %v1604
      %v1648 = vunpack.c.l.b16 %v1605
      %v1649 = vunpack.c.l.b16 %v1606
      %v1650 = vunpack.c.l.b16 %v1607
      %v1651 = vunpack.c.l.b16 %v1608
      %v1652 = vpack.c.b16 %v1635, %v1634
      %v1653 = vpack.c.b16 %v1637, %v1636
      %v1654 = vpack.c.b16 %v1639, %v1638
      %v1655 = vpack.c.b16 %v1641, %v1640
      %v1656 = vpack.c.b16 %v1643, %v1642
      %v1657 = vpack.c.b16 %v1645, %v1644
      %v1658 = vpack.c.b16 %v1647, %v1646
      %v1659 = vpack.c.b16 %v1649, %v1648
      %v1660 = vpack.c.b16 %v1651, %v1650
      %v1671 = vsel %vm309, %v1576, 0
      %v1674 = vsel %vm309, %v1578, 0
      %v1677 = vsel %vm309, %v1580, 0
      %v1680 = vsel %vm309, %v1582, 0
      %v1683 = vsel %vm309, %v1584, 0
      %v1686 = vsel %vm309, %v1586, 0
      %v1689 = vsel %vm309, %v1588, 0
      %v1692 = vsel %vm309, %v1590, 0
      %1694 = vmatprep.subr.bf16.mxu0 0
      %1695 = vmatpush1.bf16.msra.mxu0 %v1652
      %1696 = vmatprep.subr.bf16.mxu0 0
      %1697 = vmatpush1.bf16.msra.mxu0 %v1653
      %1698 = vmatprep.subr.bf16.mxu0 0
      %1699 = vmatpush1.bf16.msra.mxu0 %v1654
      %1700 = vmatprep.subr.bf16.mxu0 0
      %1701 = vmatpush1.bf16.msra.mxu0 %v1655
      %1702 = vmatprep.subr.bf16.mxu0 0
      %1703 = vmatpush1.bf16.msra.mxu0 %v1656
      %1704 = vmatprep.subr.bf16.mxu0 0
      %1705 = vmatpush1.bf16.msra.mxu0 %v1657
      %1706 = vmatprep.subr.bf16.mxu0 0
      %1707 = vmatpush1.bf16.msra.mxu0 %v1658
      %1708 = vmatprep.subr.bf16.mxu0 0
      %1709 = vmatpush1.bf16.msra.mxu0 %v1659
      %1710 = vmatprep.subr.bf16.mxu0 0
      %1711 = vmatpush1.bf16.msra.mxu0 %v1660
      %1712 = vmatprep.subr.bf16.mxu0 0
      %1713 = vmatpush1.bf16.msra.mxu0 0
      %1714 = vmatprep.subr.bf16.mxu0 0
      %1715 = vmatpush1.bf16.msra.mxu0 0
      %1716 = vmatprep.subr.bf16.mxu0 0
      %1717 = vmatpush1.bf16.msra.mxu0 0
      %1718 = vmatprep.subr.bf16.mxu0 0
      %1719 = vmatpush1.bf16.msra.mxu0 0
      %1720 = vmatprep.subr.bf16.mxu0 0
      %1721 = vmatpush1.bf16.msra.mxu0 0
      %1722 = vmatprep.subr.bf16.mxu0 0
      %1723 = vmatpush1.bf16.msra.mxu0 0
      %1724 = vmatprep.subr.bf16.mxu0 0
      %1725 = vmatpush1.bf16.msra.mxu0 0
      %1726 = vmatprep.mubr.bf16.mxu0 %v1671
      %1727 = vmatmul.mubr.bf16.gmra.mrb[0].mxu0 %v1575
      %v1728 = vpop.f32.mrb[0].mxu0
      %v1729 = vadd.f32 %v1614, %v1728
      %v1730 = vpop.f32.mrb[0].mxu0
      %v1731 = vpop.f32.mrb[0].mxu0
      %v1732 = vadd.f32 %v1614, %v1731
      %v1733 = vpop.f32.mrb[0].mxu0
      %1734 = vmatprep.mubr.bf16.mxu0 %v1674
      %1735 = vmatmul.mubr.bf16.gmra.mrb[0].mxu0 %v1577
      %v1736 = vpop.f32.mrb[0].mxu0
      %v1737 = vadd.f32 %v1614, %v1736
      %v1738 = vpop.f32.mrb[0].mxu0
      %v1739 = vpop.f32.mrb[0].mxu0
      %v1740 = vadd.f32 %v1614, %v1739
      %v1741 = vpop.f32.mrb[0].mxu0
      %1742 = vmatprep.mubr.bf16.mxu0 %v1677
      %1743 = vmatmul.mubr.bf16.gmra.mrb[0].mxu0 %v1579
      %v1744 = vpop.f32.mrb[0].mxu0
      %v1745 = vadd.f32 %v1614, %v1744
      %v1746 = vpop.f32.mrb[0].mxu0
      %v1747 = vpop.f32.mrb[0].mxu0
      %v1748 = vadd.f32 %v1614, %v1747
      %v1749 = vpop.f32.mrb[0].mxu0
      %1750 = vmatprep.mubr.bf16.mxu0 %v1680
      %1751 = vmatmul.mubr.bf16.gmra.mrb[0].mxu0 %v1581
      %v1752 = vpop.f32.mrb[0].mxu0
      %v1753 = vadd.f32 %v1614, %v1752
      %v1754 = vpop.f32.mrb[0].mxu0
      %v1755 = vpop.f32.mrb[0].mxu0
      %v1756 = vadd.f32 %v1614, %v1755
      %v1757 = vpop.f32.mrb[0].mxu0
      %1758 = vmatprep.mubr.bf16.mxu0 %v1683
      %1759 = vmatmul.mubr.bf16.gmra.mrb[0].mxu0 %v1583
      %v1760 = vpop.f32.mrb[0].mxu0
      %v1761 = vadd.f32 %v1614, %v1760
      %v1762 = vpop.f32.mrb[0].mxu0
      %v1763 = vpop.f32.mrb[0].mxu0
      %v1764 = vadd.f32 %v1614, %v1763
      %v1765 = vpop.f32.mrb[0].mxu0
      %1766 = vmatprep.mubr.bf16.mxu0 %v1686
      %1767 = vmatmul.mubr.bf16.gmra.mrb[0].mxu0 %v1585
      %v1768 = vpop.f32.mrb[0].mxu0
      %v1769 = vadd.f32 %v1614, %v1768
      %v1770 = vpop.f32.mrb[0].mxu0
      %v1771 = vpop.f32.mrb[0].mxu0
      %v1772 = vadd.f32 %v1614, %v1771
      %v1773 = vpop.f32.mrb[0].mxu0
      %1774 = vmatprep.mubr.bf16.mxu0 %v1689
      %1775 = vmatmul.mubr.bf16.gmra.mrb[0].mxu0 %v1587
      %v1776 = vpop.f32.mrb[0].mxu0
      %v1777 = vadd.f32 %v1614, %v1776
      %v1778 = vpop.f32.mrb[0].mxu0
      %v1779 = vpop.f32.mrb[0].mxu0
      %v1780 = vadd.f32 %v1614, %v1779
      %v1781 = vpop.f32.mrb[0].mxu0
      %1782 = vmatprep.mubr.bf16.mxu0 %v1692
      %1783 = vmatmul.mubr.bf16.gmra.mrb[0].mxu0 %v1589
      %v1784 = vpop.f32.mrb[0].mxu0
      %v1785 = vadd.f32 %v1614, %v1784
      %v1786 = vpop.f32.mrb[0].mxu0
      %v1787 = vpop.f32.mrb[0].mxu0
      %v1788 = vadd.f32 %v1614, %v1787
      %v1789 = vpop.f32.mrb[0].mxu0
      %1790 = vdwg.mxu0
      %v1791 = vmax.f32 %v1729, 0.0
      %v1792 = vmax.f32 %v1732, 0.0
      %v1793 = vmax.f32 %v1737, 0.0
      %v1794 = vmax.f32 %v1740, 0.0
      %v1795 = vmax.f32 %v1745, 0.0
      %v1796 = vmax.f32 %v1748, 0.0
      %v1797 = vmax.f32 %v1753, 0.0
      %v1798 = vmax.f32 %v1756, 0.0
      %v1799 = vmax.f32 %v1761, 0.0
      %v1800 = vmax.f32 %v1764, 0.0
      %v1801 = vmax.f32 %v1769, 0.0
      %v1802 = vmax.f32 %v1772, 0.0
      %v1803 = vmax.f32 %v1777, 0.0
      %v1804 = vmax.f32 %v1780, 0.0
      %v1805 = vmax.f32 %v1785, 0.0
      %v1806 = vmax.f32 %v1788, 0.0
      %v1807 = vpack.c.bf16 %v1792, %v1791
      %v1808 = vpack.c.bf16 %v1794, %v1793
      %v1809 = vpack.c.bf16 %v1796, %v1795
      %v1810 = vpack.c.bf16 %v1798, %v1797
      %v1811 = vpack.c.bf16 %v1800, %v1799
      %v1812 = vpack.c.bf16 %v1802, %v1801
      %v1813 = vpack.c.bf16 %v1804, %v1803
      %v1814 = vpack.c.bf16 %v1806, %v1805
      %v1823 = vunpack.c.l.b16 %v1807
      %v1824 = vunpack.c.h.b16 %v1807
      %v1825 = vunpack.c.l.b16 %v1808
      %v1826 = vunpack.c.h.b16 %v1808
      %v1827 = vunpack.c.l.b16 %v1809
      %v1828 = vunpack.c.h.b16 %v1809
      %v1829 = vunpack.c.l.b16 %v1810
      %v1830 = vunpack.c.h.b16 %v1810
      %v1831 = vunpack.c.l.b16 %v1811
      %v1832 = vunpack.c.h.b16 %v1811
      %v1833 = vunpack.c.l.b16 %v1812
      %v1834 = vunpack.c.h.b16 %v1812
      %v1835 = vunpack.c.l.b16 %v1813
      %v1836 = vunpack.c.h.b16 %v1813
      %v1837 = vunpack.c.l.b16 %v1814
      %v1838 = vunpack.c.h.b16 %v1814
      %v1839 = vpack.c.b16 %v1823, %v1823
      %v1840 = vpack.c.b16 %v1824, %v1824
      %v1841 = vpack.c.b16 %v1825, %v1825
      %v1842 = vpack.c.b16 %v1826, %v1826
      %v1843 = vpack.c.b16 %v1827, %v1827
      %v1844 = vpack.c.b16 %v1828, %v1828
      %v1845 = vpack.c.b16 %v1829, %v1829
      %v1846 = vpack.c.b16 %v1830, %v1830
      %v1847 = vpack.c.b16 %v1831, %v1831
      %v1848 = vpack.c.b16 %v1832, %v1832
      %v1849 = vpack.c.b16 %v1833, %v1833
      %v1850 = vpack.c.b16 %v1834, %v1834
      %v1851 = vpack.c.b16 %v1835, %v1835
      %v1852 = vpack.c.b16 %v1836, %v1836
      %v1853 = vpack.c.b16 %v1837, %v1837
      %v1854 = vpack.c.b16 %v1838, %v1838
      %1871 = vst [vmem:[%s238] sm:$0xf] %v1839
      %1872 = vst [vmem:[%s238 + $0x4] sm:$0xf] %v1840
      %1873 = vst [vmem:[%s238 + $0x8] sm:$0xf] %v1841
      %1874 = vst [vmem:[%s238 + $0xc] sm:$0xf] %v1842
      %1875 = vst [vmem:[%s238 + $0x10] sm:$0xf] %v1843
      %1876 = vst [vmem:[%s238 + $0x14] sm:$0xf] %v1844
      %1877 = vst [vmem:[%s238 + $0x18] sm:$0xf] %v1845
      %1878 = vst [vmem:[%s238 + $0x1c] sm:$0xf] %v1846
      %1879 = vst [vmem:[%s238 + $0x20] sm:$0xf] %v1847
      %1880 = vst [vmem:[%s238 + $0x24] sm:$0xf] %v1848
      %1881 = vst [vmem:[%s238 + $0x28] sm:$0xf] %v1849
      %1882 = vst [vmem:[%s238 + $0x2c] sm:$0xf] %v1850
      %1883 = vst [vmem:[%s238 + $0x30] sm:$0xf] %v1851
      %1884 = vst [vmem:[%s238 + $0x34] sm:$0xf] %v1852
      %1885 = vst [vmem:[%s238 + $0x38] sm:$0xf] %v1853
      %1886 = vst [vmem:[%s238 + $0x3c] sm:$0xf] %v1854
      %s1887 = smul.u32 16, %s21
      %p1888 = scmp.lt.s32.totalorder %s19, 1
      %s1889 = scalar_select %p1888, %s19, 1
      %p1890 = scmp.lt.s32.totalorder %s1887, 31
      %s1891 = scalar_select %p1890, %s1887, 31
      %p1892 = scmp.lt.s32.totalorder %s20, 0
      %s1893 = scalar_select %p1892, %s20, 0
      %s1894 = sadd.s32 %s1893, %s1891
      %s1895 = smul.addr %s1889, 32
      %s1896 = sadd.s32 %s1894, %s1895
      %s1897 = smul.addr %s1896, 4
      %s1898 = scalar_lea.vmem %s3, %s1897
      // Predicated region
      $region33: #{_lambda_.1} parent=31 // pred_check
        %p1899 = pneg %p133
      $region34: #{_lambda_.1} parent=31 // pred_check_branch
        %1901 = sbr.rel (%p1899) target = $region36
      $region35: #{_lambda_.1} parent=31 // pred_region
        %s1902 = smul.u32 16, %s21
      $region36: #{_lambda_.1} parent=31 // pred_fallthru
        _
    $region32: #{_lambda_.1} parent=5 // pred_fallthru
      _
    %p1903 = scmp.le.s32.totalorder 2, %s9
    // Predicated region
    $region37: #{_lambda_.1} parent=5 // pred_check
      %p1904 = pneg %p1903
    $region38: #{_lambda_.1} parent=5 // pred_check_branch
      %1906 = sbr.rel (%p1904) target = $region40
    $region39: #{_lambda_.1} parent=5 // pred_region
      %s1907 = ssub.s32 %s9, 2
      // Predicated region
      $region41: #{_lambda_.1} parent=39 // pred_check
        %p1908 = pneg %p139
      $region42: #{_lambda_.1} parent=39 // pred_check_branch
        %1910 = sbr.rel (%p1908) target = $region44
      $region43: #{_lambda_.1} parent=39 // pred_region
        %s1911 = smul.u32 16, %s24
        %p1912 = scmp.lt.s32.totalorder %s22, 1
        %s1913 = scalar_select %p1912, %s22, 1
        %p1914 = scmp.lt.s32.totalorder %s1911, 31
        %s1915 = scalar_select %p1914, %s1911, 31
        %p1916 = scmp.lt.s32.totalorder %s23, 0
        %s1917 = scalar_select %p1916, %s23, 0
        %s1918 = sadd.s32 %s1917, %s1915
        %s1919 = smul.addr %s1913, 32
        %s1920 = sadd.s32 %s1918, %s1919
        %s1921 = smul.addr %s1920, 4
        %s1922 = scalar_lea.vmem %s3, %s1921
      $region44: #{_lambda_.1} parent=39 // pred_fallthru
        _
    $region40: #{_lambda_.1} parent=5 // pred_fallthru
      _
  $region6: #{_lambda_.1} parent=0 // loop_footer
    %s13 = sadd.s32 1, %s9
  $region7: #{_lambda_.1} parent=0 // loop_footer_branch
    %8 = sbr.rel target = $region3
  $region8: #{_lambda_.1} parent=0 // loop_exit
    _

</llo_original>
